<compile_context>
chip_gen: v7x
topology: tpu7x:2x2x1
jax: 0.10.0
libtpu: 0.0.40
codegen_flags: <defaults>
</compile_context>

<pallas_src>
import functools

import jax
import jax.numpy as jnp
from jax.experimental import pallas as pl
from jax.experimental.pallas import tpu as pltpu


def mha_layer_kernel(x_ref, mask_ref, ln_ref,
                     wqkv_ref, bqkv_ref, wout_ref, bout_ref,
                     f1w_ref, f1b_ref, f2w_ref, f2b_ref,
                     o_ref, *, num_heads, d_internal):
    """One grid step: `BB` full sequences, whole transformer layer fused."""
    BB, S, D = x_ref.shape
    H, DI = num_heads, d_internal
    N = BB * S
    eps = 1e-5                       # PyTorch nn.LayerNorm default

    x = x_ref[...].reshape(N, D)     # flatten batch into rows (layout-preserving)
    ln = ln_ref[...]                 # (4, D): [ln1_g, ln1_b, ln2_g, ln2_b]

    def layernorm(v, g, b):
        mu = jnp.mean(v, axis=-1, keepdims=True)
        var = jnp.mean((v - mu) ** 2, axis=-1, keepdims=True)
        return (v - mu) * jax.lax.rsqrt(var + eps) * g + b

    xln = layernorm(x, ln[0:1, :], ln[1:2, :])

    # ---- fused, lane-dense QKV projection: one (N,D)@(D,3*H*DI) MXU matmul ----
    # (attention scale is pre-folded into the Q columns of wqkv/bqkv)
    qkv = (jnp.dot(xln, wqkv_ref[...], preferred_element_type=jnp.float32)
           + bqkv_ref[...])

    def split_heads(off):            # (N, H*DI) slab -> (H, N, DI); no matmuls
        return jnp.stack(
            [qkv[:, off + h * DI: off + (h + 1) * DI] for h in range(H)], axis=0)

    q = split_heads(0)
    k = split_heads(H * DI)
    v = split_heads(2 * H * DI)

    # ---- attention batched over heads; contract on last dims (no k.T) ----
    scores = jnp.einsum('hnd,hmd->hnm', q, k,
                        preferred_element_type=jnp.float32)
    scores = scores + mask_ref[...][None, :, :]     # block-diag causal (additive)
    scores = scores - jnp.max(scores, axis=-1, keepdims=True)
    e = jnp.exp(scores)
    attn = e / jnp.sum(e, axis=-1, keepdims=True)
    ctx = jnp.einsum('hnm,hmd->hnd', attn, v,
                     preferred_element_type=jnp.float32)      # (H, N, DI)

    # ---- fused (w0 . linear1) output projection: one lane-dense matmul ----
    ctx_flat = jnp.concatenate([ctx[h] for h in range(H)], axis=-1)   # (N, H*DI)
    mha = (jnp.dot(ctx_flat, wout_ref[...], preferred_element_type=jnp.float32)
           + bout_ref[...])

    x1 = mha + x                                              # residual 1
    x2 = layernorm(x1, ln[2:3, :], ln[3:4, :])
    h1 = jnp.maximum(
        jnp.dot(x2, f1w_ref[...], preferred_element_type=jnp.float32) + f1b_ref[...],
        0.0)
    ff = jnp.dot(h1, f2w_ref[...], preferred_element_type=jnp.float32) + f2b_ref[...]

    o_ref[...] = (x1 + ff).reshape(BB, S, D)                  # residual 2, one block store


def mha_transformer_layer(x, params, *, num_heads, d_internal, batch_block=None):
    B, S, D = x.shape
    H, DI = num_heads, d_internal
    dh = D // H

    if batch_block is None:
        # One grid step over the whole batch: best on single-TensorCore chips
        # (v5e / v6e) where the grid is a serial loop and ~0.35us/step overhead
        # dominates at these sizes.
        # TODO(synk): on v7x pass batch_block = B // 2 so the "parallel" batch
        # grid axis places one block on each of the two TensorCores.
        batch_block = B
    assert B % batch_block == 0
    steps = B // batch_block
    N = batch_block * S

    # ---------------- wrapper-side (one-time) weight fusion ----------------
    scale = float(DI) ** -0.5

    def head_major(w):                       # (H, D, DI) -> (D, H*DI)
        return jnp.transpose(w, (1, 0, 2)).reshape(D, H * DI)

    # Fold the attention scale into the Q projection so the kernel never scales
    # the (H, N, N) score tensor elementwise.
    wqkv = jnp.concatenate([head_major(params["qw"]) * scale,
                            head_major(params["kw"]),
                            head_major(params["vw"])], axis=1)        # (D, 3*H*DI)
    bqkv = jnp.concatenate([params["qb"].reshape(-1) * scale,
                            params["kb"].reshape(-1),
                            params["vb"].reshape(-1)]).reshape(1, 3 * H * DI)

    # Fold per-head w0 and the shared linear1 into one (H*DI, D) matrix so the
    # kernel does a single lane-dense output-projection matmul (no per-head dots,
    # no cross-head sum, no concat of per-head outputs).
    l1w_rows = params["l1w"].reshape(H, dh, D)
    wout = jnp.einsum('hid,hdk->hik', params["w0w"], l1w_rows).reshape(H * DI, D)
    bout = (params["w0b"].reshape(1, H * dh) @ params["l1w"]
            + params["l1b"].reshape(1, D))                            # (1, D)

    ln = jnp.stack([params["ln1_g"], params["ln1_b"],
                    params["ln2_g"], params["ln2_b"]], axis=0)        # (4, D)
    f1w, f2w = params["f1w"], params["f2w"]
    f1b = params["f1b"].reshape(1, -1)
    f2b = params["f2b"].reshape(1, -1)

    # Block-diagonal causal additive mask over the flattened batch_block*S rows,
    # precomputed here so the kernel issues no iota / integer div / select work.
    idx = jnp.arange(N)
    same_seq = (idx[:, None] // S) == (idx[None, :] // S)
    causal = (idx[:, None] % S) >= (idx[None, :] % S)
    mask_add = jnp.where(same_seq & causal, 0.0, -1e30).astype(jnp.float32)  # (N, N)

    weights = [mask_add, ln, wqkv, bqkv, wout, bout, f1w, f1b, f2w, f2b]

    def full_spec(shape):
        n = len(shape)
        return pl.BlockSpec(shape, lambda b, _n=n: (0,) * _n)

    flops = steps * (
        2 * N * D * (3 * H * DI)      # fused QKV projection
        + 2 * H * N * N * DI          # attention scores
        + 2 * H * N * N * DI          # attention-weighted values
        + 2 * N * (H * DI) * D        # fused (w0 . l1) output projection
        + 2 * N * D * (4 * D)         # FFN layer 1
        + 2 * N * (4 * D) * D)        # FFN layer 2
    cost = pl.CostEstimate(
        flops=int(flops),
        transcendentals=int(steps * H * N * N),
        bytes_accessed=int(2 * x.size * x.dtype.itemsize
                           + sum(w.size * w.dtype.itemsize for w in weights)))

    kernel = functools.partial(mha_layer_kernel, num_heads=H, d_internal=DI)
    return pl.pallas_call(
        kernel,
        out_shape=jax.ShapeDtypeStruct((B, S, D), x.dtype),
        grid=(steps,),
        in_specs=[pl.BlockSpec((batch_block, S, D), lambda b: (b, 0, 0))]
                 + [full_spec(w.shape) for w in weights],
        out_specs=pl.BlockSpec((batch_block, S, D), lambda b: (b, 0, 0)),
        compiler_params=pltpu.CompilerParams(dimension_semantics=("parallel",)),
        cost_estimate=cost,
    )(x, *weights)


def init_params(key, seq_length, d_model, num_heads, d_internal):
    d_head = d_model // num_heads
    ks = jax.random.split(key, 12)
    s = 0.05
    return {
        "ln1_g": jnp.ones((d_model,), jnp.float32),
        "ln1_b": jnp.zeros((d_model,), jnp.float32),
        "kw": s * jax.random.normal(ks[0], (num_heads, d_model, d_internal), jnp.float32),
        "kb": s * jax.random.normal(ks[1], (num_heads, d_internal), jnp.float32),
        "qw": s * jax.random.normal(ks[2], (num_heads, d_model, d_internal), jnp.float32),
        "qb": s * jax.random.normal(ks[3], (num_heads, d_internal), jnp.float32),
        "vw": s * jax.random.normal(ks[4], (num_heads, d_model, d_internal), jnp.float32),
        "vb": s * jax.random.normal(ks[5], (num_heads, d_internal), jnp.float32),
        "w0w": s * jax.random.normal(ks[6], (num_heads, d_internal, d_head), jnp.float32),
        "w0b": s * jax.random.normal(ks[7], (num_heads, d_head), jnp.float32),
        "l1w": s * jax.random.normal(ks[8], (d_model, d_model), jnp.float32),
        "l1b": jnp.zeros((d_model,), jnp.float32),
        "ln2_g": jnp.ones((d_model,), jnp.float32),
        "ln2_b": jnp.zeros((d_model,), jnp.float32),
        "f1w": s * jax.random.normal(ks[9], (d_model, 4 * d_model), jnp.float32),
        "f1b": jnp.zeros((4 * d_model,), jnp.float32),
        "f2w": s * jax.random.normal(ks[10], (4 * d_model, d_model), jnp.float32),
        "f2b": jnp.zeros((d_model,), jnp.float32),
    }


def reference_forward(x, p, d_internal):
    # Pure-JAX reference replicating the PyTorch module semantics.
    def ln(v, g, b):
        mu = jnp.mean(v, axis=-1, keepdims=True)
        var = jnp.mean((v - mu) ** 2, axis=-1, keepdims=True)
        return (v - mu) / jnp.sqrt(var + 1e-5) * g + b

    B, S, D = x.shape
    xln = ln(x, p["ln1_g"], p["ln1_b"])
    mask = jnp.tril(jnp.ones((S, S), bool))
    outs = []
    H = p["kw"].shape[0]
    for h in range(H):
        k = xln @ p["kw"][h] + p["kb"][h]
        q = xln @ p["qw"][h] + p["qb"][h]
        v = xln @ p["vw"][h] + p["vb"][h]
        w = jnp.einsum("bsd,btd->bst", q, k) * (d_internal ** -0.5)
        w = jnp.where(mask, w, -jnp.inf)
        a = jax.nn.softmax(w, axis=-1)
        outs.append(jnp.einsum("bst,btd->bsd", a, v) @ p["w0w"][h] + p["w0b"][h])
    mha = jnp.concatenate(outs, axis=-1) @ p["l1w"] + p["l1b"]
    x1 = mha + x
    x2 = ln(x1, p["ln2_g"], p["ln2_b"])
    ff = jnp.maximum(x2 @ p["f1w"] + p["f1b"], 0.0) @ p["f2w"] + p["f2b"]
    return x1 + ff


if __name__ == "__main__":
    B, S, D, H, DI = 2, 8, 32, 4, 16   # batch, seq_length, d_model, num_heads, d_internal
    key = jax.random.PRNGKey(0)
    kx, kp = jax.random.split(key)
    x = jax.random.normal(kx, (B, S, D), jnp.float32)
    params = init_params(kp, S, D, H, DI)

    out = mha_transformer_layer(x, params, num_heads=H, d_internal=DI)
    out = jax.block_until_ready(out)

    ref = reference_forward(x, params, DI)
    assert out.shape == (B, S, D)
    assert jnp.allclose(out, ref, atol=1e-4, rtol=1e-4), "mismatch vs JAX reference"
    print("KERNEL_OK")
</pallas_src>

<mosaic_0001>
module attributes {stable_mosaic.version = 11 : i64} {
  func.func @mha_layer_kernel(%arg0: i32, %arg1: memref<2x8x32xf32, #tpu.memory_space<vmem>>, %arg2: memref<16x16xf32, #tpu.memory_space<vmem>>, %arg3: memref<4x32xf32, #tpu.memory_space<vmem>>, %arg4: memref<32x192xf32, #tpu.memory_space<vmem>>, %arg5: memref<1x192xf32, #tpu.memory_space<vmem>>, %arg6: memref<64x32xf32, #tpu.memory_space<vmem>>, %arg7: memref<1x32xf32, #tpu.memory_space<vmem>>, %arg8: memref<32x128xf32, #tpu.memory_space<vmem>>, %arg9: memref<1x128xf32, #tpu.memory_space<vmem>>, %arg10: memref<128x32xf32, #tpu.memory_space<vmem>>, %arg11: memref<1x32xf32, #tpu.memory_space<vmem>>, %arg12: memref<2x8x32xf32, #tpu.memory_space<vmem>>) attributes {dimension_semantics = [#tpu.dimension_semantics<parallel>], iteration_bounds = array<i64: 1>, scalar_prefetch = 0 : i64, scratch_operands = 0 : i64, tpu.core_type = #tpu.core_type<tc>, window_params = [{transform_indices = @transform_0, window_bounds = array<i64: 2, 8, 32>}, {pipeline_mode = #tpu.pipeline_mode<synchronous>, transform_indices = @transform_1, window_bounds = array<i64: 16, 16>}, {pipeline_mode = #tpu.pipeline_mode<synchronous>, transform_indices = @transform_2, window_bounds = array<i64: 4, 32>}, {pipeline_mode = #tpu.pipeline_mode<synchronous>, transform_indices = @transform_3, window_bounds = array<i64: 32, 192>}, {pipeline_mode = #tpu.pipeline_mode<synchronous>, transform_indices = @transform_4, window_bounds = array<i64: 1, 192>}, {pipeline_mode = #tpu.pipeline_mode<synchronous>, transform_indices = @transform_5, window_bounds = array<i64: 64, 32>}, {pipeline_mode = #tpu.pipeline_mode<synchronous>, transform_indices = @transform_6, window_bounds = array<i64: 1, 32>}, {pipeline_mode = #tpu.pipeline_mode<synchronous>, transform_indices = @transform_7, window_bounds = array<i64: 32, 128>}, {pipeline_mode = #tpu.pipeline_mode<synchronous>, transform_indices = @transform_8, window_bounds = array<i64: 1, 128>}, {pipeline_mode = #tpu.pipeline_mode<synchronous>, transform_indices = @transform_9, window_bounds = array<i64: 128, 32>}, {pipeline_mode = #tpu.pipeline_mode<synchronous>, transform_indices = @transform_10, window_bounds = array<i64: 1, 32>}, {transform_indices = @transform_11, window_bounds = array<i64: 2, 8, 32>}]} {
    %c0 = arith.constant 0 : index
    %c0_0 = arith.constant 0 : index
    %c0_1 = arith.constant 0 : index
    %0 = vector.load %arg1[%c0, %c0_0, %c0_1] : memref<2x8x32xf32, #tpu.memory_space<vmem>>, vector<2x8x32xf32>
    %1 = vector.shape_cast %0 : vector<2x8x32xf32> to vector<16x32xf32>
    %c0_2 = arith.constant 0 : index
    %c0_3 = arith.constant 0 : index
    %2 = vector.load %arg3[%c0_2, %c0_3] : memref<4x32xf32, #tpu.memory_space<vmem>>, vector<4x32xf32>
    %3 = vector.extract_strided_slice %2 {offsets = [0, 0], sizes = [1, 32], strides = [1, 1]} : vector<4x32xf32> to vector<1x32xf32>
    %4 = vector.extract_strided_slice %2 {offsets = [1, 0], sizes = [1, 32], strides = [1, 1]} : vector<4x32xf32> to vector<1x32xf32>
    %cst = arith.constant dense<0.000000e+00> : vector<16xf32>
    %5 = vector.multi_reduction <add>, %1, %cst [1] : vector<16x32xf32> to vector<16xf32>
    %6 = vector.shape_cast %5 : vector<16xf32> to vector<16x1xf32>
    %cst_4 = arith.constant 3.200000e+01 : f32
    %7 = vector.broadcast %cst_4 : f32 to vector<16x1xf32>
    %8 = arith.divf %6, %7 : vector<16x1xf32>
    %9 = vector.broadcast %8 : vector<16x1xf32> to vector<16x32xf32>
    %10 = arith.subf %1, %9 : vector<16x32xf32>
    %11 = arith.mulf %10, %10 : vector<16x32xf32>
    %cst_5 = arith.constant dense<0.000000e+00> : vector<16xf32>
    %12 = vector.multi_reduction <add>, %11, %cst_5 [1] : vector<16x32xf32> to vector<16xf32>
    %13 = vector.shape_cast %12 : vector<16xf32> to vector<16x1xf32>
    %cst_6 = arith.constant 3.200000e+01 : f32
    %14 = vector.broadcast %cst_6 : f32 to vector<16x1xf32>
    %15 = arith.divf %13, %14 : vector<16x1xf32>
    %16 = vector.broadcast %8 : vector<16x1xf32> to vector<16x32xf32>
    %17 = arith.subf %1, %16 : vector<16x32xf32>
    %cst_7 = arith.constant 9.99999974E-6 : f32
    %18 = vector.broadcast %cst_7 : f32 to vector<16x1xf32>
    %19 = arith.addf %15, %18 : vector<16x1xf32>
    %20 = math.rsqrt %19 : vector<16x1xf32>
    %21 = vector.broadcast %20 : vector<16x1xf32> to vector<16x32xf32>
    %22 = arith.mulf %17, %21 : vector<16x32xf32>
    %23 = vector.broadcast %3 : vector<1x32xf32> to vector<16x32xf32>
    %24 = arith.mulf %22, %23 : vector<16x32xf32>
    %25 = vector.broadcast %4 : vector<1x32xf32> to vector<16x32xf32>
    %26 = arith.addf %24, %25 : vector<16x32xf32>
    %c0_8 = arith.constant 0 : index
    %c0_9 = arith.constant 0 : index
    %27 = vector.load %arg4[%c0_8, %c0_9] : memref<32x192xf32, #tpu.memory_space<vmem>>, vector<32x192xf32>
    %cst_10 = arith.constant dense<0.000000e+00> : vector<16x192xf32>
    %28 = tpu.matmul %26, %27, %cst_10 {dimension_numbers = #tpu.dot_dimension_numbers<[1], [0], [0], [1], [0, 0, 1, 1], [], []>} : vector<16x32xf32>, vector<32x192xf32>, vector<16x192xf32> -> vector<16x192xf32>
    %c0_11 = arith.constant 0 : index
    %c0_12 = arith.constant 0 : index
    %29 = vector.load %arg5[%c0_11, %c0_12] : memref<1x192xf32, #tpu.memory_space<vmem>>, vector<1x192xf32>
    %30 = vector.broadcast %29 : vector<1x192xf32> to vector<16x192xf32>
    %31 = arith.addf %28, %30 : vector<16x192xf32>
    %32 = vector.extract_strided_slice %31 {offsets = [0, 0], sizes = [16, 16], strides = [1, 1]} : vector<16x192xf32> to vector<16x16xf32>
    %33 = vector.extract_strided_slice %31 {offsets = [0, 16], sizes = [16, 16], strides = [1, 1]} : vector<16x192xf32> to vector<16x16xf32>
    %34 = vector.extract_strided_slice %31 {offsets = [0, 32], sizes = [16, 16], strides = [1, 1]} : vector<16x192xf32> to vector<16x16xf32>
    %35 = vector.extract_strided_slice %31 {offsets = [0, 48], sizes = [16, 16], strides = [1, 1]} : vector<16x192xf32> to vector<16x16xf32>
    %36 = vector.shape_cast %32 : vector<16x16xf32> to vector<1x16x16xf32>
    %37 = vector.shape_cast %33 : vector<16x16xf32> to vector<1x16x16xf32>
    %38 = vector.shape_cast %34 : vector<16x16xf32> to vector<1x16x16xf32>
    %39 = vector.shape_cast %35 : vector<16x16xf32> to vector<1x16x16xf32>
    %40 = tpu.concatenate %36, %37, %38, %39 in 0 : vector<1x16x16xf32>, vector<1x16x16xf32>, vector<1x16x16xf32>, vector<1x16x16xf32> -> vector<4x16x16xf32>
    %41 = vector.extract_strided_slice %31 {offsets = [0, 64], sizes = [16, 16], strides = [1, 1]} : vector<16x192xf32> to vector<16x16xf32>
    %42 = vector.extract_strided_slice %31 {offsets = [0, 80], sizes = [16, 16], strides = [1, 1]} : vector<16x192xf32> to vector<16x16xf32>
    %43 = vector.extract_strided_slice %31 {offsets = [0, 96], sizes = [16, 16], strides = [1, 1]} : vector<16x192xf32> to vector<16x16xf32>
    %44 = vector.extract_strided_slice %31 {offsets = [0, 112], sizes = [16, 16], strides = [1, 1]} : vector<16x192xf32> to vector<16x16xf32>
    %45 = vector.shape_cast %41 : vector<16x16xf32> to vector<1x16x16xf32>
    %46 = vector.shape_cast %42 : vector<16x16xf32> to vector<1x16x16xf32>
    %47 = vector.shape_cast %43 : vector<16x16xf32> to vector<1x16x16xf32>
    %48 = vector.shape_cast %44 : vector<16x16xf32> to vector<1x16x16xf32>
    %49 = tpu.concatenate %45, %46, %47, %48 in 0 : vector<1x16x16xf32>, vector<1x16x16xf32>, vector<1x16x16xf32>, vector<1x16x16xf32> -> vector<4x16x16xf32>
    %50 = vector.extract_strided_slice %31 {offsets = [0, 128], sizes = [16, 16], strides = [1, 1]} : vector<16x192xf32> to vector<16x16xf32>
    %51 = vector.extract_strided_slice %31 {offsets = [0, 144], sizes = [16, 16], strides = [1, 1]} : vector<16x192xf32> to vector<16x16xf32>
    %52 = vector.extract_strided_slice %31 {offsets = [0, 160], sizes = [16, 16], strides = [1, 1]} : vector<16x192xf32> to vector<16x16xf32>
    %53 = vector.extract_strided_slice %31 {offsets = [0, 176], sizes = [16, 16], strides = [1, 1]} : vector<16x192xf32> to vector<16x16xf32>
    %54 = vector.shape_cast %50 : vector<16x16xf32> to vector<1x16x16xf32>
    %55 = vector.shape_cast %51 : vector<16x16xf32> to vector<1x16x16xf32>
    %56 = vector.shape_cast %52 : vector<16x16xf32> to vector<1x16x16xf32>
    %57 = vector.shape_cast %53 : vector<16x16xf32> to vector<1x16x16xf32>
    %58 = tpu.concatenate %54, %55, %56, %57 in 0 : vector<1x16x16xf32>, vector<1x16x16xf32>, vector<1x16x16xf32>, vector<1x16x16xf32> -> vector<4x16x16xf32>
    "tpu.trace_start"() <{level = 10 : i32, message = "hnd,hmd->hnm"}> : () -> ()
    %cst_13 = arith.constant dense<0.000000e+00> : vector<4x16x16xf32>
    %59 = tpu.matmul %40, %49, %cst_13 {dimension_numbers = #tpu.dot_dimension_numbers<[2], [2], [1], [1], [0, 0, 0, 1, 1, 1], [0], [0]>} : vector<4x16x16xf32>, vector<4x16x16xf32>, vector<4x16x16xf32> -> vector<4x16x16xf32>
    "tpu.trace_stop"() : () -> ()
    %c0_14 = arith.constant 0 : index
    %c0_15 = arith.constant 0 : index
    %60 = vector.load %arg2[%c0_14, %c0_15] : memref<16x16xf32, #tpu.memory_space<vmem>>, vector<16x16xf32>
    %61 = vector.shape_cast %60 : vector<16x16xf32> to vector<1x16x16xf32>
    %62 = vector.broadcast %61 : vector<1x16x16xf32> to vector<4x16x16xf32>
    %63 = arith.addf %59, %62 : vector<4x16x16xf32>
    %cst_16 = arith.constant dense<0xFF800000> : vector<4x16xf32>
    %64 = vector.multi_reduction <maximumf>, %63, %cst_16 [2] : vector<4x16x16xf32> to vector<4x16xf32>
    %65 = vector.shape_cast %64 : vector<4x16xf32> to vector<4x16x1xf32>
    %66 = vector.broadcast %65 : vector<4x16x1xf32> to vector<4x16x16xf32>
    %67 = arith.subf %63, %66 : vector<4x16x16xf32>
    %68 = math.exp %67 : vector<4x16x16xf32>
    %cst_17 = arith.constant dense<0.000000e+00> : vector<4x16xf32>
    %69 = vector.multi_reduction <add>, %68, %cst_17 [2] : vector<4x16x16xf32> to vector<4x16xf32>
    %70 = vector.shape_cast %69 : vector<4x16xf32> to vector<4x16x1xf32>
    %71 = vector.broadcast %70 : vector<4x16x1xf32> to vector<4x16x16xf32>
    %72 = arith.divf %68, %71 : vector<4x16x16xf32>
    "tpu.trace_start"() <{level = 10 : i32, message = "hnm,hmd->hnd"}> : () -> ()
    %cst_18 = arith.constant dense<0.000000e+00> : vector<4x16x16xf32>
    %73 = tpu.matmul %72, %58, %cst_18 {dimension_numbers = #tpu.dot_dimension_numbers<[2], [1], [1], [2], [0, 0, 0, 1, 1, 2], [0], [0]>} : vector<4x16x16xf32>, vector<4x16x16xf32>, vector<4x16x16xf32> -> vector<4x16x16xf32>
    "tpu.trace_stop"() : () -> ()
    %74 = vector.extract_strided_slice %73 {offsets = [0, 0, 0], sizes = [1, 16, 16], strides = [1, 1, 1]} : vector<4x16x16xf32> to vector<1x16x16xf32>
    %75 = vector.shape_cast %74 : vector<1x16x16xf32> to vector<16x16xf32>
    %76 = vector.extract_strided_slice %73 {offsets = [1, 0, 0], sizes = [1, 16, 16], strides = [1, 1, 1]} : vector<4x16x16xf32> to vector<1x16x16xf32>
    %77 = vector.shape_cast %76 : vector<1x16x16xf32> to vector<16x16xf32>
    %78 = vector.extract_strided_slice %73 {offsets = [2, 0, 0], sizes = [1, 16, 16], strides = [1, 1, 1]} : vector<4x16x16xf32> to vector<1x16x16xf32>
    %79 = vector.shape_cast %78 : vector<1x16x16xf32> to vector<16x16xf32>
    %80 = vector.extract_strided_slice %73 {offsets = [3, 0, 0], sizes = [1, 16, 16], strides = [1, 1, 1]} : vector<4x16x16xf32> to vector<1x16x16xf32>
    %81 = vector.shape_cast %80 : vector<1x16x16xf32> to vector<16x16xf32>
    %82 = tpu.concatenate %75, %77, %79, %81 in 1 : vector<16x16xf32>, vector<16x16xf32>, vector<16x16xf32>, vector<16x16xf32> -> vector<16x64xf32>
    %c0_19 = arith.constant 0 : index
    %c0_20 = arith.constant 0 : index
    %83 = vector.load %arg6[%c0_19, %c0_20] : memref<64x32xf32, #tpu.memory_space<vmem>>, vector<64x32xf32>
    %cst_21 = arith.constant dense<0.000000e+00> : vector<16x32xf32>
    %84 = tpu.matmul %82, %83, %cst_21 {dimension_numbers = #tpu.dot_dimension_numbers<[1], [0], [0], [1], [0, 0, 1, 1], [], []>} : vector<16x64xf32>, vector<64x32xf32>, vector<16x32xf32> -> vector<16x32xf32>
    %c0_22 = arith.constant 0 : index
    %c0_23 = arith.constant 0 : index
    %85 = vector.load %arg7[%c0_22, %c0_23] : memref<1x32xf32, #tpu.memory_space<vmem>>, vector<1x32xf32>
    %86 = vector.broadcast %85 : vector<1x32xf32> to vector<16x32xf32>
    %87 = arith.addf %84, %86 : vector<16x32xf32>
    %88 = arith.addf %87, %1 : vector<16x32xf32>
    %89 = vector.extract_strided_slice %2 {offsets = [2, 0], sizes = [1, 32], strides = [1, 1]} : vector<4x32xf32> to vector<1x32xf32>
    %90 = vector.extract_strided_slice %2 {offsets = [3, 0], sizes = [1, 32], strides = [1, 1]} : vector<4x32xf32> to vector<1x32xf32>
    %cst_24 = arith.constant dense<0.000000e+00> : vector<16xf32>
    %91 = vector.multi_reduction <add>, %88, %cst_24 [1] : vector<16x32xf32> to vector<16xf32>
    %92 = vector.shape_cast %91 : vector<16xf32> to vector<16x1xf32>
    %cst_25 = arith.constant 3.200000e+01 : f32
    %93 = vector.broadcast %cst_25 : f32 to vector<16x1xf32>
    %94 = arith.divf %92, %93 : vector<16x1xf32>
    %95 = vector.broadcast %94 : vector<16x1xf32> to vector<16x32xf32>
    %96 = arith.subf %88, %95 : vector<16x32xf32>
    %97 = arith.mulf %96, %96 : vector<16x32xf32>
    %cst_26 = arith.constant dense<0.000000e+00> : vector<16xf32>
    %98 = vector.multi_reduction <add>, %97, %cst_26 [1] : vector<16x32xf32> to vector<16xf32>
    %99 = vector.shape_cast %98 : vector<16xf32> to vector<16x1xf32>
    %cst_27 = arith.constant 3.200000e+01 : f32
    %100 = vector.broadcast %cst_27 : f32 to vector<16x1xf32>
    %101 = arith.divf %99, %100 : vector<16x1xf32>
    %102 = vector.broadcast %94 : vector<16x1xf32> to vector<16x32xf32>
    %103 = arith.subf %88, %102 : vector<16x32xf32>
    %cst_28 = arith.constant 9.99999974E-6 : f32
    %104 = vector.broadcast %cst_28 : f32 to vector<16x1xf32>
    %105 = arith.addf %101, %104 : vector<16x1xf32>
    %106 = math.rsqrt %105 : vector<16x1xf32>
    %107 = vector.broadcast %106 : vector<16x1xf32> to vector<16x32xf32>
    %108 = arith.mulf %103, %107 : vector<16x32xf32>
    %109 = vector.broadcast %89 : vector<1x32xf32> to vector<16x32xf32>
    %110 = arith.mulf %108, %109 : vector<16x32xf32>
    %111 = vector.broadcast %90 : vector<1x32xf32> to vector<16x32xf32>
    %112 = arith.addf %110, %111 : vector<16x32xf32>
    %c0_29 = arith.constant 0 : index
    %c0_30 = arith.constant 0 : index
    %113 = vector.load %arg8[%c0_29, %c0_30] : memref<32x128xf32, #tpu.memory_space<vmem>>, vector<32x128xf32>
    %cst_31 = arith.constant dense<0.000000e+00> : vector<16x128xf32>
    %114 = tpu.matmul %112, %113, %cst_31 {dimension_numbers = #tpu.dot_dimension_numbers<[1], [0], [0], [1], [0, 0, 1, 1], [], []>} : vector<16x32xf32>, vector<32x128xf32>, vector<16x128xf32> -> vector<16x128xf32>
    %c0_32 = arith.constant 0 : index
    %c0_33 = arith.constant 0 : index
    %115 = vector.load %arg9[%c0_32, %c0_33] : memref<1x128xf32, #tpu.memory_space<vmem>>, vector<1x128xf32>
    %116 = vector.broadcast %115 : vector<1x128xf32> to vector<16x128xf32>
    %117 = arith.addf %114, %116 : vector<16x128xf32>
    %cst_34 = arith.constant 0.000000e+00 : f32
    %118 = vector.broadcast %cst_34 : f32 to vector<16x128xf32>
    %119 = arith.maximumf %117, %118 : vector<16x128xf32>
    %c0_35 = arith.constant 0 : index
    %c0_36 = arith.constant 0 : index
    %120 = vector.load %arg10[%c0_35, %c0_36] : memref<128x32xf32, #tpu.memory_space<vmem>>, vector<128x32xf32>
    %cst_37 = arith.constant dense<0.000000e+00> : vector<16x32xf32>
    %121 = tpu.matmul %119, %120, %cst_37 {dimension_numbers = #tpu.dot_dimension_numbers<[1], [0], [0], [1], [0, 0, 1, 1], [], []>} : vector<16x128xf32>, vector<128x32xf32>, vector<16x32xf32> -> vector<16x32xf32>
    %c0_38 = arith.constant 0 : index
    %c0_39 = arith.constant 0 : index
    %122 = vector.load %arg11[%c0_38, %c0_39] : memref<1x32xf32, #tpu.memory_space<vmem>>, vector<1x32xf32>
    %123 = vector.broadcast %122 : vector<1x32xf32> to vector<16x32xf32>
    %124 = arith.addf %121, %123 : vector<16x32xf32>
    %125 = arith.addf %88, %124 : vector<16x32xf32>
    %126 = vector.shape_cast %125 : vector<16x32xf32> to vector<2x8x32xf32>
    %c0_40 = arith.constant 0 : index
    %c0_41 = arith.constant 0 : index
    %c0_42 = arith.constant 0 : index
    %127 = vector.load %arg12[%c0_40, %c0_41, %c0_42] : memref<2x8x32xf32, #tpu.memory_space<vmem>>, vector<2x8x32xf32>
    tpu.vector_store %arg12[%c0_40, %c0_41, %c0_42], %126 {strides = array<i32>} : memref<2x8x32xf32, #tpu.memory_space<vmem>>, vector<2x8x32xf32>,
    return
  }
  func.func @transform_0(%arg0: i32) -> (i32, i32, i32) {
    %c0_i32 = arith.constant 0 : i32
    %c0_i32_0 = arith.constant 0 : i32
    %c0_i32_1 = arith.constant 0 : i32
    return %arg0, %c0_i32, %c0_i32_0 : i32, i32, i32
  }
  func.func @transform_1(%arg0: i32) -> (i32, i32) {
    %c0_i32 = arith.constant 0 : i32
    %c0_i32_0 = arith.constant 0 : i32
    %c0_i32_1 = arith.constant 0 : i32
    return %c0_i32, %c0_i32_0 : i32, i32
  }
  func.func @transform_2(%arg0: i32) -> (i32, i32) {
    %c0_i32 = arith.constant 0 : i32
    %c0_i32_0 = arith.constant 0 : i32
    %c0_i32_1 = arith.constant 0 : i32
    return %c0_i32, %c0_i32_0 : i32, i32
  }
  func.func @transform_3(%arg0: i32) -> (i32, i32) {
    %c0_i32 = arith.constant 0 : i32
    %c0_i32_0 = arith.constant 0 : i32
    %c0_i32_1 = arith.constant 0 : i32
    return %c0_i32, %c0_i32_0 : i32, i32
  }
  func.func @transform_4(%arg0: i32) -> (i32, i32) {
    %c0_i32 = arith.constant 0 : i32
    %c0_i32_0 = arith.constant 0 : i32
    %c0_i32_1 = arith.constant 0 : i32
    return %c0_i32, %c0_i32_0 : i32, i32
  }
  func.func @transform_5(%arg0: i32) -> (i32, i32) {
    %c0_i32 = arith.constant 0 : i32
    %c0_i32_0 = arith.constant 0 : i32
    %c0_i32_1 = arith.constant 0 : i32
    return %c0_i32, %c0_i32_0 : i32, i32
  }
  func.func @transform_6(%arg0: i32) -> (i32, i32) {
    %c0_i32 = arith.constant 0 : i32
    %c0_i32_0 = arith.constant 0 : i32
    %c0_i32_1 = arith.constant 0 : i32
    return %c0_i32, %c0_i32_0 : i32, i32
  }
  func.func @transform_7(%arg0: i32) -> (i32, i32) {
    %c0_i32 = arith.constant 0 : i32
    %c0_i32_0 = arith.constant 0 : i32
    %c0_i32_1 = arith.constant 0 : i32
    return %c0_i32, %c0_i32_0 : i32, i32
  }
  func.func @transform_8(%arg0: i32) -> (i32, i32) {
    %c0_i32 = arith.constant 0 : i32
    %c0_i32_0 = arith.constant 0 : i32
    %c0_i32_1 = arith.constant 0 : i32
    return %c0_i32, %c0_i32_0 : i32, i32
  }
  func.func @transform_9(%arg0: i32) -> (i32, i32) {
    %c0_i32 = arith.constant 0 : i32
    %c0_i32_0 = arith.constant 0 : i32
    %c0_i32_1 = arith.constant 0 : i32
    return %c0_i32, %c0_i32_0 : i32, i32
  }
  func.func @transform_10(%arg0: i32) -> (i32, i32) {
    %c0_i32 = arith.constant 0 : i32
    %c0_i32_0 = arith.constant 0 : i32
    %c0_i32_1 = arith.constant 0 : i32
    return %c0_i32, %c0_i32_0 : i32, i32
  }
  func.func @transform_11(%arg0: i32) -> (i32, i32, i32) {
    %c0_i32 = arith.constant 0 : i32
    %c0_i32_0 = arith.constant 0 : i32
    %c0_i32_1 = arith.constant 0 : i32
    return %arg0, %c0_i32, %c0_i32_0 : i32, i32, i32
  }
}

</mosaic_0001>

<llo_original>
// kernel: tpu_custom_call.1
$region0: #{tpu_custom_call.1}
  #allocation0 [shape = 'u32[]', space=smem, size = 0x4, offset = 0x4, fixed_abs, tag = 'smem constant byte address 0x4 - core index']
  #allocation1 [shape = 'u32[144,128]{1,0:T(1,128)}', space=vmem, size = 0x12000, scoped, tag = 'internal scratch']
  %s0 = inlined_call_operand.vmem [shape: f32[2,8,32], index: 0, kind: input, shape index: {}]
  %s1 = inlined_call_operand.vmem [shape: f32[16,16], index: 1, kind: input, shape index: {}]
  %s2 = inlined_call_operand.vmem [shape: f32[4,32], index: 2, kind: input, shape index: {}]
  %s3 = inlined_call_operand.vmem [shape: f32[32,192], index: 3, kind: input, shape index: {}]
  %s4 = inlined_call_operand.vmem [shape: f32[1,192], index: 4, kind: input, shape index: {}]
  %s5 = inlined_call_operand.vmem [shape: f32[64,32], index: 5, kind: input, shape index: {}]
  %s6 = inlined_call_operand.vmem [shape: f32[1,32], index: 6, kind: input, shape index: {}]
  %s7 = inlined_call_operand.vmem [shape: f32[32,128], index: 7, kind: input, shape index: {}]
  %s8 = inlined_call_operand.vmem [shape: f32[1,128], index: 8, kind: input, shape index: {}]
  %s9 = inlined_call_operand.vmem [shape: f32[128,32], index: 9, kind: input, shape index: {}]
  %s10 = inlined_call_operand.vmem [shape: f32[1,32], index: 10, kind: input, shape index: {}]
  %s11 = inlined_call_operand.hbm [shape: f32[2,8,32], index: 11, kind: output, shape index: {}]
  %s12 = sld [smem:[#allocation0]]
  $region54: #{tpu_custom_call.1} parent=0
    _
  %s14 = ssub.s32 1, %s12
  %s15 = scalar_select 0, %s14, %s12
  $region1: #{tpu_custom_call.1} parent=0
    #allocation2 [shape = 'u8[8192]{0}', space=vmem, size = 0x2000, scoped, tag = 'output window, operand 0, single buffered']
    #allocation3 [shape = 's32[1]{0}', space=sflag, size = 0x4, scoped, tag = 'scoped memory for tpu_custom_call.1']
    %16 = vsyncpa [#allocation3], 0
    // Predicated region
    $region2: #{tpu_custom_call.1} parent=1 // pred_check
      _
    $region3: #{tpu_custom_call.1} parent=1 // pred_check_branch
      %18 = sbr.rel (0) target = $region5
    $region4: #{tpu_custom_call.1} parent=1 // pred_region
      _
    $region5: #{tpu_custom_call.1} parent=1 // pred_fallthru
      _
    // Predicated region
    $region6: #{tpu_custom_call.1} parent=1 // pred_check
      _
    $region7: #{tpu_custom_call.1} parent=1 // pred_check_branch
      %20 = sbr.rel (0) target = $region9
    $region8: #{tpu_custom_call.1} parent=1 // pred_region
      _
    $region9: #{tpu_custom_call.1} parent=1 // pred_fallthru
      _
    // Predicated region
    $region10: #{tpu_custom_call.1} parent=1 // pred_check
      _
    $region11: #{tpu_custom_call.1} parent=1 // pred_check_branch
      %22 = sbr.rel (0) target = $region13
    $region12: #{tpu_custom_call.1} parent=1 // pred_region
      _
    $region13: #{tpu_custom_call.1} parent=1 // pred_fallthru
      _
    // Predicated region
    $region14: #{tpu_custom_call.1} parent=1 // pred_check
      _
    $region15: #{tpu_custom_call.1} parent=1 // pred_check_branch
      %24 = sbr.rel (0) target = $region17
    $region16: #{tpu_custom_call.1} parent=1 // pred_region
      _
    $region17: #{tpu_custom_call.1} parent=1 // pred_fallthru
      _
    // Predicated region
    $region18: #{tpu_custom_call.1} parent=1 // pred_check
      _
    $region19: #{tpu_custom_call.1} parent=1 // pred_check_branch
      %26 = sbr.rel (0) target = $region21
    $region20: #{tpu_custom_call.1} parent=1 // pred_region
      _
    $region21: #{tpu_custom_call.1} parent=1 // pred_fallthru
      _
    // Predicated region
    $region22: #{tpu_custom_call.1} parent=1 // pred_check
      _
    $region23: #{tpu_custom_call.1} parent=1 // pred_check_branch
      %28 = sbr.rel (0) target = $region25
    $region24: #{tpu_custom_call.1} parent=1 // pred_region
      _
    $region25: #{tpu_custom_call.1} parent=1 // pred_fallthru
      _
    // Predicated region
    $region26: #{tpu_custom_call.1} parent=1 // pred_check
      _
    $region27: #{tpu_custom_call.1} parent=1 // pred_check_branch
      %30 = sbr.rel (0) target = $region29
    $region28: #{tpu_custom_call.1} parent=1 // pred_region
      _
    $region29: #{tpu_custom_call.1} parent=1 // pred_fallthru
      _
    // Predicated region
    $region30: #{tpu_custom_call.1} parent=1 // pred_check
      _
    $region31: #{tpu_custom_call.1} parent=1 // pred_check_branch
      %32 = sbr.rel (0) target = $region33
    $region32: #{tpu_custom_call.1} parent=1 // pred_region
      _
    $region33: #{tpu_custom_call.1} parent=1 // pred_fallthru
      _
    // Predicated region
    $region34: #{tpu_custom_call.1} parent=1 // pred_check
      _
    $region35: #{tpu_custom_call.1} parent=1 // pred_check_branch
      %34 = sbr.rel (0) target = $region37
    $region36: #{tpu_custom_call.1} parent=1 // pred_region
      _
    $region37: #{tpu_custom_call.1} parent=1 // pred_fallthru
      _
    // Predicated region
    $region38: #{tpu_custom_call.1} parent=1 // pred_check
      _
    $region39: #{tpu_custom_call.1} parent=1 // pred_check_branch
      %36 = sbr.rel (0) target = $region41
    $region40: #{tpu_custom_call.1} parent=1 // pred_region
      _
    $region41: #{tpu_custom_call.1} parent=1 // pred_fallthru
      _
    // Predicated region
    $region42: #{tpu_custom_call.1} parent=1 // pred_check
      _
    $region43: #{tpu_custom_call.1} parent=1 // pred_check_branch
      %38 = sbr.rel (0) target = $region45
    $region44: #{tpu_custom_call.1} parent=1 // pred_region
      _
    $region45: #{tpu_custom_call.1} parent=1 // pred_fallthru
      _
    %v39 = vld [vmem:[%s0] sm:$0xff]
    %v40 = vld [vmem:[%s0 + $0x8] sm:$0xff]
    %v41 = vld [vmem:[%s2] sm:$0xf]
    %vm42 = vcmask 261120
    %v43 = vsel %vm42, %v39, 0.0
    %44 = vadd.xlane.f32.xlu0 %v43
    %v45 = vpop.xlane.xlu0 %44
    %v46 = vsel %vm42, %v40, 0.0
    %47 = vadd.xlane.f32.xlu0 %v46
    %v48 = vpop.xlane.xlu0 %47
    %v49 = vrcp.pop 32.0
    %v50 = vmul.f32 %v45, %v49
    %v51 = vmul.f32 %v48, %v49
    %v52 = vsub.f32 %v39, %v50
    %v53 = vsub.f32 %v40, %v51
    %v54 = vmul.f32 %v52, %v52
    %v55 = vmul.f32 %v53, %v53
    %v56 = vsel %vm42, %v54, 0.0
    %57 = vadd.xlane.f32.xlu0 %v56
    %v58 = vpop.xlane.xlu0 %57
    %v59 = vsel %vm42, %v55, 0.0
    %60 = vadd.xlane.f32.xlu0 %v59
    %v61 = vpop.xlane.xlu0 %60
    %v62 = vmul.f32 %v58, %v49
    %v63 = vmul.f32 %v61, %v49
    %v64 = vadd.f32 %v62, 1e-05
    %v65 = vadd.f32 %v63, 1e-05
    %v66 = vrsqrt.pop %v64
    %v67 = vrsqrt.pop %v65
    %v68 = vmul.f32 %v52, %v66
    %v69 = vmul.f32 %v53, %v67
    %v70 = vlaneseq
    %v71 = vshrl.u32 %v70, 7
    %v72 = vsub.s32 0, %v71
    %v73 = vrot.slane %v41, %v72
    %v74 = vmul.f32 %v68, %v73
    %v75 = vmul.f32 %v69, %v73
    %v76 = vlaneseq
    %v77 = vshrl.u32 %v76, 7
    %v78 = vsub.s32 1, %v77
    %v79 = vrot.slane %v41, %v78
    %v80 = vadd.f32 %v74, %v79
    %v81 = vadd.f32 %v75, %v79
    %v82 = vld [vmem:[%s3] sm:$0xff]
    %v83 = vld [vmem:[%s3 + $0x8] sm:$0xff]
    %v84 = vld [vmem:[%s3 + $0x10] sm:$0xff]
    %v85 = vld [vmem:[%s3 + $0x18] sm:$0xff]
    %v86 = vld [vmem:[%s3 + $0x20] sm:$0xff]
    %v87 = vld [vmem:[%s3 + $0x28] sm:$0xff]
    %v88 = vld [vmem:[%s3 + $0x30] sm:$0xff]
    %v89 = vld [vmem:[%s3 + $0x38] sm:$0xff]
    %v90 = vld [vmem:[%s4] sm:$0x3]
    %v92 = vlaneseq
    %v93 = vshrl.u32 %v92, 7
    %v94 = vsub.s32 0, %v93
    %v95 = vrot.slane %v90, %v94
    %v96 = vlaneseq
    %v97 = vshrl.u32 %v96, 7
    %v98 = vsub.s32 1, %v97
    %v99 = vrot.slane %v90, %v98
    %v103 = vsel %vm42, %v80, 0
    %v106 = vsel %vm42, %v81, 0
    %108 = vmatprep.subr.mxu0 %v83
    %109 = vmatpush1.msra.mxu0 %v82
    %110 = vmatprep.subr.mxu0 %v85
    %111 = vmatpush1.msra.mxu0 %v84
    %112 = vmatprep.subr.mxu0 %v87
    %113 = vmatpush1.msra.mxu0 %v86
    %114 = vmatprep.subr.mxu0 %v89
    %115 = vmatpush1.msra.mxu0 %v88
    %116 = vmatprep.subr.mxu0 0.0
    %117 = vmatpush1.msra.mxu0 0.0
    %118 = vmatprep.subr.mxu0 0.0
    %119 = vmatpush1.msra.mxu0 0.0
    %120 = vmatprep.subr.mxu0 0.0
    %121 = vmatpush1.msra.mxu0 0.0
    %122 = vmatprep.subr.mxu0 0.0
    %123 = vmatpush1.msra.mxu0 0.0
    %124 = vmatprep.subr.mxu0 0.0
    %125 = vmatpush1.msra.mxu0 0.0
    %126 = vmatprep.subr.mxu0 0.0
    %127 = vmatpush1.msra.mxu0 0.0
    %128 = vmatprep.subr.mxu0 0.0
    %129 = vmatpush1.msra.mxu0 0.0
    %130 = vmatprep.subr.mxu0 0.0
    %131 = vmatpush1.msra.mxu0 0.0
    %132 = vmatprep.subr.mxu0 0.0
    %133 = vmatpush1.msra.mxu0 0.0
    %134 = vmatprep.subr.mxu0 0.0
    %135 = vmatpush1.msra.mxu0 0.0
    %136 = vmatprep.subr.mxu0 0.0
    %137 = vmatpush1.msra.mxu0 0.0
    %138 = vmatprep.subr.mxu0 0.0
    %139 = vmatpush1.msra.mxu0 0.0
    %140 = vmatprep.subr.mxu0 0.0
    %141 = vmatpush1.msra.mxu0 0.0
    %142 = vmatprep.subr.mxu0 0.0
    %143 = vmatpush1.msra.mxu0 0.0
    %144 = vmatprep.subr.mxu0 0.0
    %145 = vmatpush1.msra.mxu0 0.0
    %146 = vmatprep.subr.mxu0 0.0
    %147 = vmatpush1.msra.mxu0 0.0
    %148 = vmatprep.subr.mxu0 0.0
    %149 = vmatpush1.msra.mxu0 0.0
    %150 = vmatprep.subr.mxu0 0.0
    %151 = vmatpush1.msra.mxu0 0.0
    %152 = vmatprep.subr.mxu0 0.0
    %153 = vmatpush1.msra.mxu0 0.0
    %154 = vmatprep.subr.mxu0 0.0
    %155 = vmatpush1.msra.mxu0 0.0
    %156 = vmatprep.subr.mxu0 0.0
    %157 = vmatpush1.msra.mxu0 0.0
    %158 = vmatprep.subr.mxu0 0.0
    %159 = vmatpush1.msra.mxu0 0.0
    %160 = vmatprep.subr.mxu0 0.0
    %161 = vmatpush1.msra.mxu0 0.0
    %162 = vmatprep.subr.mxu0 0.0
    %163 = vmatpush1.msra.mxu0 0.0
    %164 = vmatprep.subr.mxu0 0.0
    %165 = vmatpush1.msra.mxu0 0.0
    %166 = vmatprep.subr.mxu0 0.0
    %167 = vmatpush1.msra.mxu0 0.0
    %168 = vmatprep.subr.mxu0 0.0
    %169 = vmatpush1.msra.mxu0 0.0
    %170 = vmatprep.subr.mxu0 0.0
    %171 = vmatpush1.msra.mxu0 0.0
    %172 = vmatprep.mubr.f32.mxu0 0.0
    %173 = vmatmul.mubr.f32.gmra.mrb[0].mxu0 %v103
    %v174 = vpop.f32.mrb[0].mxu0
    %v175 = vadd.f32 %v95, %v174
    %v176 = vpop.f32.mrb[0].mxu0
    %v177 = vadd.f32 %v99, %v176
    %178 = vmatprep.mubr.f32.mxu0 0.0
    %179 = vmatmul.mubr.f32.gmra.mrb[0].mxu0 %v106
    %v180 = vpop.f32.mrb[0].mxu0
    %v181 = vadd.f32 %v95, %v180
    %v182 = vpop.f32.mrb[0].mxu0
    %v183 = vadd.f32 %v99, %v182
    %184 = vdwg.mxu0
    %187 = vrot.lane.b32.xlu0 %v175, 112
    %v188 = vpop.permute.xlu0 %187
    %189 = vrot.lane.b32.xlu0 %v181, 112
    %v190 = vpop.permute.xlu0 %189
    %191 = vrot.lane.b32.xlu0 %v175, 96
    %v192 = vpop.permute.xlu0 %191
    %193 = vrot.lane.b32.xlu0 %v181, 96
    %v194 = vpop.permute.xlu0 %193
    %195 = vrot.lane.b32.xlu0 %v175, 80
    %v196 = vpop.permute.xlu0 %195
    %197 = vrot.lane.b32.xlu0 %v181, 80
    %v198 = vpop.permute.xlu0 %197
    %201 = vrot.lane.b32.xlu0 %v177, 112
    %v202 = vpop.permute.xlu0 %201
    %203 = vrot.lane.b32.xlu0 %v183, 112
    %v204 = vpop.permute.xlu0 %203
    %207 = vrot.lane.b32.xlu0 %v177, 96
    %v208 = vpop.permute.xlu0 %207
    %209 = vrot.lane.b32.xlu0 %v183, 96
    %v210 = vpop.permute.xlu0 %209
    %213 = vrot.lane.b32.xlu0 %v177, 80
    %v214 = vpop.permute.xlu0 %213
    %215 = vrot.lane.b32.xlu0 %v183, 80
    %v216 = vpop.permute.xlu0 %215
    %v219 = vld [vmem:[%s1] sm:$0xff]
    %v220 = vld [vmem:[%s1 + $0x8] sm:$0xff]
    %221 = vrot.lane.b32.xlu0 %v175, 64
    %v222 = vpop.permute.xlu0 %221
    %223 = vrot.lane.b32.xlu0 %v181, 64
    %v224 = vpop.permute.xlu0 %223
    %vm225 = vcmask 130048
    %v226 = vsel %vm225, %v175, 0
    %v228 = vsel %vm225, %v181, 0
    %v230 = vsel %vm225, %v222, 0
    %v232 = vsel %vm225, %v224, 0
    %234 = vmatprep.subr.mxu0 0.0
    %235 = vmatpush1.xpose.msra.mxu0 %v230
    %236 = vmatprep.subr.mxu0 0.0
    %237 = vmatpush1.xpose.msra.mxu0 %v232
    %238 = vmatprep.subr.mxu0 0.0
    %239 = vmatpush1.xpose.msra.mxu0 0.0
    %240 = vmatprep.subr.mxu0 0.0
    %241 = vmatpush1.xpose.msra.mxu0 0.0
    %242 = vmatprep.subr.mxu0 0.0
    %243 = vmatpush1.xpose.msra.mxu0 0.0
    %244 = vmatprep.subr.mxu0 0.0
    %245 = vmatpush1.xpose.msra.mxu0 0.0
    %246 = vmatprep.subr.mxu0 0.0
    %247 = vmatpush1.xpose.msra.mxu0 0.0
    %248 = vmatprep.subr.mxu0 0.0
    %249 = vmatpush1.xpose.msra.mxu0 0.0
    %250 = vmatprep.subr.mxu0 0.0
    %251 = vmatpush1.xpose.msra.mxu0 0.0
    %252 = vmatprep.subr.mxu0 0.0
    %253 = vmatpush1.xpose.msra.mxu0 0.0
    %254 = vmatprep.subr.mxu0 0.0
    %255 = vmatpush1.xpose.msra.mxu0 0.0
    %256 = vmatprep.subr.mxu0 0.0
    %257 = vmatpush1.xpose.msra.mxu0 0.0
    %258 = vmatprep.subr.mxu0 0.0
    %259 = vmatpush1.xpose.msra.mxu0 0.0
    %260 = vmatprep.subr.mxu0 0.0
    %261 = vmatpush1.xpose.msra.mxu0 0.0
    %262 = vmatprep.subr.mxu0 0.0
    %263 = vmatpush1.xpose.msra.mxu0 0.0
    %264 = vmatprep.subr.mxu0 0.0
    %265 = vmatpush1.xpose.msra.mxu0 0.0
    %266 = vmatprep.subr.mxu0 0.0
    %267 = vmatpush1.xpose.msra.mxu0 0.0
    %268 = vmatprep.subr.mxu0 0.0
    %269 = vmatpush1.xpose.msra.mxu0 0.0
    %270 = vmatprep.subr.mxu0 0.0
    %271 = vmatpush1.xpose.msra.mxu0 0.0
    %272 = vmatprep.subr.mxu0 0.0
    %273 = vmatpush1.xpose.msra.mxu0 0.0
    %274 = vmatprep.subr.mxu0 0.0
    %275 = vmatpush1.xpose.msra.mxu0 0.0
    %276 = vmatprep.subr.mxu0 0.0
    %277 = vmatpush1.xpose.msra.mxu0 0.0
    %278 = vmatprep.subr.mxu0 0.0
    %279 = vmatpush1.xpose.msra.mxu0 0.0
    %280 = vmatprep.subr.mxu0 0.0
    %281 = vmatpush1.xpose.msra.mxu0 0.0
    %282 = vmatprep.subr.mxu0 0.0
    %283 = vmatpush1.xpose.msra.mxu0 0.0
    %284 = vmatprep.subr.mxu0 0.0
    %285 = vmatpush1.xpose.msra.mxu0 0.0
    %286 = vmatprep.subr.mxu0 0.0
    %287 = vmatpush1.xpose.msra.mxu0 0.0
    %288 = vmatprep.subr.mxu0 0.0
    %289 = vmatpush1.xpose.msra.mxu0 0.0
    %290 = vmatprep.subr.mxu0 0.0
    %291 = vmatpush1.xpose.msra.mxu0 0.0
    %292 = vmatprep.subr.mxu0 0.0
    %293 = vmatpush1.xpose.msra.mxu0 0.0
    %294 = vmatprep.subr.mxu0 0.0
    %295 = vmatpush1.xpose.msra.mxu0 0.0
    %296 = vmatprep.subr.mxu0 0.0
    %297 = vmatpush1.xpose.msra.mxu0 0.0
    %298 = vmatprep.mubr.f32.mxu0 0.0
    %299 = vmatmul.mubr.f32.gmra.mrb[0].mxu0 %v226
    %v300 = vpop.f32.mrb[0].mxu0
    %v301 = vadd.f32 %v219, %v300
    %v302 = vpop.f32.mrb[0].mxu0
    %303 = vmatprep.mubr.f32.mxu0 0.0
    %304 = vmatmul.mubr.f32.gmra.mrb[0].mxu0 %v228
    %v305 = vpop.f32.mrb[0].mxu0
    %v306 = vadd.f32 %v220, %v305
    %v307 = vpop.f32.mrb[0].mxu0
    %308 = vdwg.mxu0
    %309 = vrot.lane.b32.xlu0 %v188, 64
    %v310 = vpop.permute.xlu0 %309
    %311 = vrot.lane.b32.xlu0 %v190, 64
    %v312 = vpop.permute.xlu0 %311
    %v313 = vsel %vm225, %v188, 0
    %v315 = vsel %vm225, %v190, 0
    %v317 = vsel %vm225, %v310, 0
    %v319 = vsel %vm225, %v312, 0
    %321 = vmatprep.subr.mxu0 0.0
    %322 = vmatpush1.xpose.msra.mxu0 %v317
    %323 = vmatprep.subr.mxu0 0.0
    %324 = vmatpush1.xpose.msra.mxu0 %v319
    %325 = vmatprep.subr.mxu0 0.0
    %326 = vmatpush1.xpose.msra.mxu0 0.0
    %327 = vmatprep.subr.mxu0 0.0
    %328 = vmatpush1.xpose.msra.mxu0 0.0
    %329 = vmatprep.subr.mxu0 0.0
    %330 = vmatpush1.xpose.msra.mxu0 0.0
    %331 = vmatprep.subr.mxu0 0.0
    %332 = vmatpush1.xpose.msra.mxu0 0.0
    %333 = vmatprep.subr.mxu0 0.0
    %334 = vmatpush1.xpose.msra.mxu0 0.0
    %335 = vmatprep.subr.mxu0 0.0
    %336 = vmatpush1.xpose.msra.mxu0 0.0
    %337 = vmatprep.subr.mxu0 0.0
    %338 = vmatpush1.xpose.msra.mxu0 0.0
    %339 = vmatprep.subr.mxu0 0.0
    %340 = vmatpush1.xpose.msra.mxu0 0.0
    %341 = vmatprep.subr.mxu0 0.0
    %342 = vmatpush1.xpose.msra.mxu0 0.0
    %343 = vmatprep.subr.mxu0 0.0
    %344 = vmatpush1.xpose.msra.mxu0 0.0
    %345 = vmatprep.subr.mxu0 0.0
    %346 = vmatpush1.xpose.msra.mxu0 0.0
    %347 = vmatprep.subr.mxu0 0.0
    %348 = vmatpush1.xpose.msra.mxu0 0.0
    %349 = vmatprep.subr.mxu0 0.0
    %350 = vmatpush1.xpose.msra.mxu0 0.0
    %351 = vmatprep.subr.mxu0 0.0
    %352 = vmatpush1.xpose.msra.mxu0 0.0
    %353 = vmatprep.subr.mxu0 0.0
    %354 = vmatpush1.xpose.msra.mxu0 0.0
    %355 = vmatprep.subr.mxu0 0.0
    %356 = vmatpush1.xpose.msra.mxu0 0.0
    %357 = vmatprep.subr.mxu0 0.0
    %358 = vmatpush1.xpose.msra.mxu0 0.0
    %359 = vmatprep.subr.mxu0 0.0
    %360 = vmatpush1.xpose.msra.mxu0 0.0
    %361 = vmatprep.subr.mxu0 0.0
    %362 = vmatpush1.xpose.msra.mxu0 0.0
    %363 = vmatprep.subr.mxu0 0.0
    %364 = vmatpush1.xpose.msra.mxu0 0.0
    %365 = vmatprep.subr.mxu0 0.0
    %366 = vmatpush1.xpose.msra.mxu0 0.0
    %367 = vmatprep.subr.mxu0 0.0
    %368 = vmatpush1.xpose.msra.mxu0 0.0
    %369 = vmatprep.subr.mxu0 0.0
    %370 = vmatpush1.xpose.msra.mxu0 0.0
    %371 = vmatprep.subr.mxu0 0.0
    %372 = vmatpush1.xpose.msra.mxu0 0.0
    %373 = vmatprep.subr.mxu0 0.0
    %374 = vmatpush1.xpose.msra.mxu0 0.0
    %375 = vmatprep.subr.mxu0 0.0
    %376 = vmatpush1.xpose.msra.mxu0 0.0
    %377 = vmatprep.subr.mxu0 0.0
    %378 = vmatpush1.xpose.msra.mxu0 0.0
    %379 = vmatprep.subr.mxu0 0.0
    %380 = vmatpush1.xpose.msra.mxu0 0.0
    %381 = vmatprep.subr.mxu0 0.0
    %382 = vmatpush1.xpose.msra.mxu0 0.0
    %383 = vmatprep.subr.mxu0 0.0
    %384 = vmatpush1.xpose.msra.mxu0 0.0
    %385 = vmatprep.mubr.f32.mxu0 0.0
    %386 = vmatmul.mubr.f32.gmra.mrb[0].mxu0 %v313
    %v387 = vpop.f32.mrb[0].mxu0
    %v388 = vadd.f32 %v219, %v387
    %v389 = vpop.f32.mrb[0].mxu0
    %390 = vmatprep.mubr.f32.mxu0 0.0
    %391 = vmatmul.mubr.f32.gmra.mrb[0].mxu0 %v315
    %v392 = vpop.f32.mrb[0].mxu0
    %v393 = vadd.f32 %v220, %v392
    %v394 = vpop.f32.mrb[0].mxu0
    %395 = vdwg.mxu0
    %396 = vrot.lane.b32.xlu0 %v192, 64
    %v397 = vpop.permute.xlu0 %396
    %398 = vrot.lane.b32.xlu0 %v194, 64
    %v399 = vpop.permute.xlu0 %398
    %v400 = vsel %vm225, %v192, 0
    %v402 = vsel %vm225, %v194, 0
    %v404 = vsel %vm225, %v397, 0
    %v406 = vsel %vm225, %v399, 0
    %408 = vmatprep.subr.mxu0 0.0
    %409 = vmatpush1.xpose.msra.mxu0 %v404
    %410 = vmatprep.subr.mxu0 0.0
    %411 = vmatpush1.xpose.msra.mxu0 %v406
    %412 = vmatprep.subr.mxu0 0.0
    %413 = vmatpush1.xpose.msra.mxu0 0.0
    %414 = vmatprep.subr.mxu0 0.0
    %415 = vmatpush1.xpose.msra.mxu0 0.0
    %416 = vmatprep.subr.mxu0 0.0
    %417 = vmatpush1.xpose.msra.mxu0 0.0
    %418 = vmatprep.subr.mxu0 0.0
    %419 = vmatpush1.xpose.msra.mxu0 0.0
    %420 = vmatprep.subr.mxu0 0.0
    %421 = vmatpush1.xpose.msra.mxu0 0.0
    %422 = vmatprep.subr.mxu0 0.0
    %423 = vmatpush1.xpose.msra.mxu0 0.0
    %424 = vmatprep.subr.mxu0 0.0
    %425 = vmatpush1.xpose.msra.mxu0 0.0
    %426 = vmatprep.subr.mxu0 0.0
    %427 = vmatpush1.xpose.msra.mxu0 0.0
    %428 = vmatprep.subr.mxu0 0.0
    %429 = vmatpush1.xpose.msra.mxu0 0.0
    %430 = vmatprep.subr.mxu0 0.0
    %431 = vmatpush1.xpose.msra.mxu0 0.0
    %432 = vmatprep.subr.mxu0 0.0
    %433 = vmatpush1.xpose.msra.mxu0 0.0
    %434 = vmatprep.subr.mxu0 0.0
    %435 = vmatpush1.xpose.msra.mxu0 0.0
    %436 = vmatprep.subr.mxu0 0.0
    %437 = vmatpush1.xpose.msra.mxu0 0.0
    %438 = vmatprep.subr.mxu0 0.0
    %439 = vmatpush1.xpose.msra.mxu0 0.0
    %440 = vmatprep.subr.mxu0 0.0
    %441 = vmatpush1.xpose.msra.mxu0 0.0
    %442 = vmatprep.subr.mxu0 0.0
    %443 = vmatpush1.xpose.msra.mxu0 0.0
    %444 = vmatprep.subr.mxu0 0.0
    %445 = vmatpush1.xpose.msra.mxu0 0.0
    %446 = vmatprep.subr.mxu0 0.0
    %447 = vmatpush1.xpose.msra.mxu0 0.0
    %448 = vmatprep.subr.mxu0 0.0
    %449 = vmatpush1.xpose.msra.mxu0 0.0
    %450 = vmatprep.subr.mxu0 0.0
    %451 = vmatpush1.xpose.msra.mxu0 0.0
    %452 = vmatprep.subr.mxu0 0.0
    %453 = vmatpush1.xpose.msra.mxu0 0.0
    %454 = vmatprep.subr.mxu0 0.0
    %455 = vmatpush1.xpose.msra.mxu0 0.0
    %456 = vmatprep.subr.mxu0 0.0
    %457 = vmatpush1.xpose.msra.mxu0 0.0
    %458 = vmatprep.subr.mxu0 0.0
    %459 = vmatpush1.xpose.msra.mxu0 0.0
    %460 = vmatprep.subr.mxu0 0.0
    %461 = vmatpush1.xpose.msra.mxu0 0.0
    %462 = vmatprep.subr.mxu0 0.0
    %463 = vmatpush1.xpose.msra.mxu0 0.0
    %464 = vmatprep.subr.mxu0 0.0
    %465 = vmatpush1.xpose.msra.mxu0 0.0
    %466 = vmatprep.subr.mxu0 0.0
    %467 = vmatpush1.xpose.msra.mxu0 0.0
    %468 = vmatprep.subr.mxu0 0.0
    %469 = vmatpush1.xpose.msra.mxu0 0.0
    %470 = vmatprep.subr.mxu0 0.0
    %471 = vmatpush1.xpose.msra.mxu0 0.0
    %472 = vmatprep.mubr.f32.mxu0 0.0
    %473 = vmatmul.mubr.f32.gmra.mrb[0].mxu0 %v400
    %v474 = vpop.f32.mrb[0].mxu0
    %v475 = vadd.f32 %v219, %v474
    %v476 = vpop.f32.mrb[0].mxu0
    %477 = vmatprep.mubr.f32.mxu0 0.0
    %478 = vmatmul.mubr.f32.gmra.mrb[0].mxu0 %v402
    %v479 = vpop.f32.mrb[0].mxu0
    %v480 = vadd.f32 %v220, %v479
    %v481 = vpop.f32.mrb[0].mxu0
    %482 = vdwg.mxu0
    %483 = vrot.lane.b32.xlu0 %v196, 64
    %v484 = vpop.permute.xlu0 %483
    %485 = vrot.lane.b32.xlu0 %v198, 64
    %v486 = vpop.permute.xlu0 %485
    %v487 = vsel %vm225, %v196, 0
    %v489 = vsel %vm225, %v198, 0
    %v491 = vsel %vm225, %v484, 0
    %v493 = vsel %vm225, %v486, 0
    %495 = vmatprep.subr.mxu0 0.0
    %496 = vmatpush1.xpose.msra.mxu0 %v491
    %497 = vmatprep.subr.mxu0 0.0
    %498 = vmatpush1.xpose.msra.mxu0 %v493
    %499 = vmatprep.subr.mxu0 0.0
    %500 = vmatpush1.xpose.msra.mxu0 0.0
    %501 = vmatprep.subr.mxu0 0.0
    %502 = vmatpush1.xpose.msra.mxu0 0.0
    %503 = vmatprep.subr.mxu0 0.0
    %504 = vmatpush1.xpose.msra.mxu0 0.0
    %505 = vmatprep.subr.mxu0 0.0
    %506 = vmatpush1.xpose.msra.mxu0 0.0
    %507 = vmatprep.subr.mxu0 0.0
    %508 = vmatpush1.xpose.msra.mxu0 0.0
    %509 = vmatprep.subr.mxu0 0.0
    %510 = vmatpush1.xpose.msra.mxu0 0.0
    %511 = vmatprep.subr.mxu0 0.0
    %512 = vmatpush1.xpose.msra.mxu0 0.0
    %513 = vmatprep.subr.mxu0 0.0
    %514 = vmatpush1.xpose.msra.mxu0 0.0
    %515 = vmatprep.subr.mxu0 0.0
    %516 = vmatpush1.xpose.msra.mxu0 0.0
    %517 = vmatprep.subr.mxu0 0.0
    %518 = vmatpush1.xpose.msra.mxu0 0.0
    %519 = vmatprep.subr.mxu0 0.0
    %520 = vmatpush1.xpose.msra.mxu0 0.0
    %521 = vmatprep.subr.mxu0 0.0
    %522 = vmatpush1.xpose.msra.mxu0 0.0
    %523 = vmatprep.subr.mxu0 0.0
    %524 = vmatpush1.xpose.msra.mxu0 0.0
    %525 = vmatprep.subr.mxu0 0.0
    %526 = vmatpush1.xpose.msra.mxu0 0.0
    %527 = vmatprep.subr.mxu0 0.0
    %528 = vmatpush1.xpose.msra.mxu0 0.0
    %529 = vmatprep.subr.mxu0 0.0
    %530 = vmatpush1.xpose.msra.mxu0 0.0
    %531 = vmatprep.subr.mxu0 0.0
    %532 = vmatpush1.xpose.msra.mxu0 0.0
    %533 = vmatprep.subr.mxu0 0.0
    %534 = vmatpush1.xpose.msra.mxu0 0.0
    %535 = vmatprep.subr.mxu0 0.0
    %536 = vmatpush1.xpose.msra.mxu0 0.0
    %537 = vmatprep.subr.mxu0 0.0
    %538 = vmatpush1.xpose.msra.mxu0 0.0
    %539 = vmatprep.subr.mxu0 0.0
    %540 = vmatpush1.xpose.msra.mxu0 0.0
    %541 = vmatprep.subr.mxu0 0.0
    %542 = vmatpush1.xpose.msra.mxu0 0.0
    %543 = vmatprep.subr.mxu0 0.0
    %544 = vmatpush1.xpose.msra.mxu0 0.0
    %545 = vmatprep.subr.mxu0 0.0
    %546 = vmatpush1.xpose.msra.mxu0 0.0
    %547 = vmatprep.subr.mxu0 0.0
    %548 = vmatpush1.xpose.msra.mxu0 0.0
    %549 = vmatprep.subr.mxu0 0.0
    %550 = vmatpush1.xpose.msra.mxu0 0.0
    %551 = vmatprep.subr.mxu0 0.0
    %552 = vmatpush1.xpose.msra.mxu0 0.0
    %553 = vmatprep.subr.mxu0 0.0
    %554 = vmatpush1.xpose.msra.mxu0 0.0
    %555 = vmatprep.subr.mxu0 0.0
    %556 = vmatpush1.xpose.msra.mxu0 0.0
    %557 = vmatprep.subr.mxu0 0.0
    %558 = vmatpush1.xpose.msra.mxu0 0.0
    %559 = vmatprep.mubr.f32.mxu0 0.0
    %560 = vmatmul.mubr.f32.gmra.mrb[0].mxu0 %v487
    %v561 = vpop.f32.mrb[0].mxu0
    %v562 = vadd.f32 %v219, %v561
    %v563 = vpop.f32.mrb[0].mxu0
    %564 = vmatprep.mubr.f32.mxu0 0.0
    %565 = vmatmul.mubr.f32.gmra.mrb[0].mxu0 %v489
    %v566 = vpop.f32.mrb[0].mxu0
    %v567 = vadd.f32 %v220, %v566
    %v568 = vpop.f32.mrb[0].mxu0
    %569 = vdwg.mxu0
    %v570 = vsel %vm225, %v301, -inf
    %571 = vmax.xlane.f32.xlu0 %v570
    %v572 = vpop.xlane.xlu0 %571
    %v573 = vsel %vm225, %v306, -inf
    %574 = vmax.xlane.f32.xlu0 %v573
    %v575 = vpop.xlane.xlu0 %574
    %v576 = vsel %vm225, %v388, -inf
    %577 = vmax.xlane.f32.xlu0 %v576
    %v578 = vpop.xlane.xlu0 %577
    %v579 = vsel %vm225, %v393, -inf
    %580 = vmax.xlane.f32.xlu0 %v579
    %v581 = vpop.xlane.xlu0 %580
    %v582 = vsel %vm225, %v475, -inf
    %583 = vmax.xlane.f32.xlu0 %v582
    %v584 = vpop.xlane.xlu0 %583
    %v585 = vsel %vm225, %v480, -inf
    %586 = vmax.xlane.f32.xlu0 %v585
    %v587 = vpop.xlane.xlu0 %586
    %v588 = vsel %vm225, %v562, -inf
    %589 = vmax.xlane.f32.xlu0 %v588
    %v590 = vpop.xlane.xlu0 %589
    %v591 = vsel %vm225, %v567, -inf
    %592 = vmax.xlane.f32.xlu0 %v591
    %v593 = vpop.xlane.xlu0 %592
    %v594 = vsub.f32 %v301, %v572
    %v595 = vsub.f32 %v306, %v575
    %v596 = vsub.f32 %v388, %v578
    %v597 = vsub.f32 %v393, %v581
    %v598 = vsub.f32 %v475, %v584
    %v599 = vsub.f32 %v480, %v587
    %v600 = vsub.f32 %v562, %v590
    %v601 = vsub.f32 %v567, %v593
    %v602 = vmul.f32 %v594, 1.442695
    %v603 = vpow.pop %v602
    %v604 = vmul.f32 %v595, 1.442695
    %v605 = vpow.pop %v604
    %v606 = vmul.f32 %v596, 1.442695
    %v607 = vpow.pop %v606
    %v608 = vmul.f32 %v597, 1.442695
    %v609 = vpow.pop %v608
    %v610 = vmul.f32 %v598, 1.442695
    %v611 = vpow.pop %v610
    %v612 = vmul.f32 %v599, 1.442695
    %v613 = vpow.pop %v612
    %v614 = vmul.f32 %v600, 1.442695
    %v615 = vpow.pop %v614
    %v616 = vmul.f32 %v601, 1.442695
    %v617 = vpow.pop %v616
    %v618 = vsel %vm225, %v603, 0.0
    %619 = vadd.xlane.f32.xlu0 %v618
    %v620 = vpop.xlane.xlu0 %619
    %v621 = vsel %vm225, %v605, 0.0
    %622 = vadd.xlane.f32.xlu0 %v621
    %v623 = vpop.xlane.xlu0 %622
    %v624 = vsel %vm225, %v607, 0.0
    %625 = vadd.xlane.f32.xlu0 %v624
    %v626 = vpop.xlane.xlu0 %625
    %v627 = vsel %vm225, %v609, 0.0
    %628 = vadd.xlane.f32.xlu0 %v627
    %v629 = vpop.xlane.xlu0 %628
    %v630 = vsel %vm225, %v611, 0.0
    %631 = vadd.xlane.f32.xlu0 %v630
    %v632 = vpop.xlane.xlu0 %631
    %v633 = vsel %vm225, %v613, 0.0
    %634 = vadd.xlane.f32.xlu0 %v633
    %v635 = vpop.xlane.xlu0 %634
    %v636 = vsel %vm225, %v615, 0.0
    %637 = vadd.xlane.f32.xlu0 %v636
    %v638 = vpop.xlane.xlu0 %637
    %v639 = vsel %vm225, %v617, 0.0
    %640 = vadd.xlane.f32.xlu0 %v639
    %v641 = vpop.xlane.xlu0 %640
    %v642 = vrcp.pop %v620
    %v643 = vmul.f32 %v603, %v642
    %v644 = vrcp.pop %v623
    %v645 = vmul.f32 %v605, %v644
    %v646 = vrcp.pop %v626
    %v647 = vmul.f32 %v607, %v646
    %v648 = vrcp.pop %v629
    %v649 = vmul.f32 %v609, %v648
    %v650 = vrcp.pop %v632
    %v651 = vmul.f32 %v611, %v650
    %v652 = vrcp.pop %v635
    %v653 = vmul.f32 %v613, %v652
    %v654 = vrcp.pop %v638
    %v655 = vmul.f32 %v615, %v654
    %v656 = vrcp.pop %v641
    %v657 = vmul.f32 %v617, %v656
    %v659 = vsel %vm225, %v643, 0
    %v662 = vsel %vm225, %v645, 0
    %664 = vmatprep.subr.mxu0 0.0
    %665 = vmatpush1.msra.mxu0 %v177
    %666 = vmatprep.subr.mxu0 0.0
    %667 = vmatpush1.msra.mxu0 %v183
    %668 = vmatprep.subr.mxu0 0.0
    %669 = vmatpush1.msra.mxu0 0.0
    %670 = vmatprep.subr.mxu0 0.0
    %671 = vmatpush1.msra.mxu0 0.0
    %672 = vmatprep.subr.mxu0 0.0
    %673 = vmatpush1.msra.mxu0 0.0
    %674 = vmatprep.subr.mxu0 0.0
    %675 = vmatpush1.msra.mxu0 0.0
    %676 = vmatprep.subr.mxu0 0.0
    %677 = vmatpush1.msra.mxu0 0.0
    %678 = vmatprep.subr.mxu0 0.0
    %679 = vmatpush1.msra.mxu0 0.0
    %680 = vmatprep.subr.mxu0 0.0
    %681 = vmatpush1.msra.mxu0 0.0
    %682 = vmatprep.subr.mxu0 0.0
    %683 = vmatpush1.msra.mxu0 0.0
    %684 = vmatprep.subr.mxu0 0.0
    %685 = vmatpush1.msra.mxu0 0.0
    %686 = vmatprep.subr.mxu0 0.0
    %687 = vmatpush1.msra.mxu0 0.0
    %688 = vmatprep.subr.mxu0 0.0
    %689 = vmatpush1.msra.mxu0 0.0
    %690 = vmatprep.subr.mxu0 0.0
    %691 = vmatpush1.msra.mxu0 0.0
    %692 = vmatprep.subr.mxu0 0.0
    %693 = vmatpush1.msra.mxu0 0.0
    %694 = vmatprep.subr.mxu0 0.0
    %695 = vmatpush1.msra.mxu0 0.0
    %696 = vmatprep.subr.mxu0 0.0
    %697 = vmatpush1.msra.mxu0 0.0
    %698 = vmatprep.subr.mxu0 0.0
    %699 = vmatpush1.msra.mxu0 0.0
    %700 = vmatprep.subr.mxu0 0.0
    %701 = vmatpush1.msra.mxu0 0.0
    %702 = vmatprep.subr.mxu0 0.0
    %703 = vmatpush1.msra.mxu0 0.0
    %704 = vmatprep.subr.mxu0 0.0
    %705 = vmatpush1.msra.mxu0 0.0
    %706 = vmatprep.subr.mxu0 0.0
    %707 = vmatpush1.msra.mxu0 0.0
    %708 = vmatprep.subr.mxu0 0.0
    %709 = vmatpush1.msra.mxu0 0.0
    %710 = vmatprep.subr.mxu0 0.0
    %711 = vmatpush1.msra.mxu0 0.0
    %712 = vmatprep.subr.mxu0 0.0
    %713 = vmatpush1.msra.mxu0 0.0
    %714 = vmatprep.subr.mxu0 0.0
    %715 = vmatpush1.msra.mxu0 0.0
    %716 = vmatprep.subr.mxu0 0.0
    %717 = vmatpush1.msra.mxu0 0.0
    %718 = vmatprep.subr.mxu0 0.0
    %719 = vmatpush1.msra.mxu0 0.0
    %720 = vmatprep.subr.mxu0 0.0
    %721 = vmatpush1.msra.mxu0 0.0
    %722 = vmatprep.subr.mxu0 0.0
    %723 = vmatpush1.msra.mxu0 0.0
    %724 = vmatprep.subr.mxu0 0.0
    %725 = vmatpush1.msra.mxu0 0.0
    %726 = vmatprep.subr.mxu0 0.0
    %727 = vmatpush1.msra.mxu0 0.0
    %728 = vmatprep.mubr.f32.mxu0 0.0
    %729 = vmatmul.mubr.f32.gmra.mrb[0].mxu0 %v659
    %v730 = vpop.f32.mrb[0].mxu0
    %v731 = vadd.f32 0.0, %v730
    %v732 = vpop.f32.mrb[0].mxu0
    %733 = vmatprep.mubr.f32.mxu0 0.0
    %734 = vmatmul.mubr.f32.gmra.mrb[0].mxu0 %v662
    %v735 = vpop.f32.mrb[0].mxu0
    %v736 = vadd.f32 0.0, %v735
    %v737 = vpop.f32.mrb[0].mxu0
    %738 = vdwg.mxu0
    %v740 = vsel %vm225, %v647, 0
    %v743 = vsel %vm225, %v649, 0
    %745 = vmatprep.subr.mxu0 0.0
    %746 = vmatpush1.msra.mxu0 %v202
    %747 = vmatprep.subr.mxu0 0.0
    %748 = vmatpush1.msra.mxu0 %v204
    %749 = vmatprep.subr.mxu0 0.0
    %750 = vmatpush1.msra.mxu0 0.0
    %751 = vmatprep.subr.mxu0 0.0
    %752 = vmatpush1.msra.mxu0 0.0
    %753 = vmatprep.subr.mxu0 0.0
    %754 = vmatpush1.msra.mxu0 0.0
    %755 = vmatprep.subr.mxu0 0.0
    %756 = vmatpush1.msra.mxu0 0.0
    %757 = vmatprep.subr.mxu0 0.0
    %758 = vmatpush1.msra.mxu0 0.0
    %759 = vmatprep.subr.mxu0 0.0
    %760 = vmatpush1.msra.mxu0 0.0
    %761 = vmatprep.subr.mxu0 0.0
    %762 = vmatpush1.msra.mxu0 0.0
    %763 = vmatprep.subr.mxu0 0.0
    %764 = vmatpush1.msra.mxu0 0.0
    %765 = vmatprep.subr.mxu0 0.0
    %766 = vmatpush1.msra.mxu0 0.0
    %767 = vmatprep.subr.mxu0 0.0
    %768 = vmatpush1.msra.mxu0 0.0
    %769 = vmatprep.subr.mxu0 0.0
    %770 = vmatpush1.msra.mxu0 0.0
    %771 = vmatprep.subr.mxu0 0.0
    %772 = vmatpush1.msra.mxu0 0.0
    %773 = vmatprep.subr.mxu0 0.0
    %774 = vmatpush1.msra.mxu0 0.0
    %775 = vmatprep.subr.mxu0 0.0
    %776 = vmatpush1.msra.mxu0 0.0
    %777 = vmatprep.subr.mxu0 0.0
    %778 = vmatpush1.msra.mxu0 0.0
    %779 = vmatprep.subr.mxu0 0.0
    %780 = vmatpush1.msra.mxu0 0.0
    %781 = vmatprep.subr.mxu0 0.0
    %782 = vmatpush1.msra.mxu0 0.0
    %783 = vmatprep.subr.mxu0 0.0
    %784 = vmatpush1.msra.mxu0 0.0
    %785 = vmatprep.subr.mxu0 0.0
    %786 = vmatpush1.msra.mxu0 0.0
    %787 = vmatprep.subr.mxu0 0.0
    %788 = vmatpush1.msra.mxu0 0.0
    %789 = vmatprep.subr.mxu0 0.0
    %790 = vmatpush1.msra.mxu0 0.0
    %791 = vmatprep.subr.mxu0 0.0
    %792 = vmatpush1.msra.mxu0 0.0
    %793 = vmatprep.subr.mxu0 0.0
    %794 = vmatpush1.msra.mxu0 0.0
    %795 = vmatprep.subr.mxu0 0.0
    %796 = vmatpush1.msra.mxu0 0.0
    %797 = vmatprep.subr.mxu0 0.0
    %798 = vmatpush1.msra.mxu0 0.0
    %799 = vmatprep.subr.mxu0 0.0
    %800 = vmatpush1.msra.mxu0 0.0
    %801 = vmatprep.subr.mxu0 0.0
    %802 = vmatpush1.msra.mxu0 0.0
    %803 = vmatprep.subr.mxu0 0.0
    %804 = vmatpush1.msra.mxu0 0.0
    %805 = vmatprep.subr.mxu0 0.0
    %806 = vmatpush1.msra.mxu0 0.0
    %807 = vmatprep.subr.mxu0 0.0
    %808 = vmatpush1.msra.mxu0 0.0
    %809 = vmatprep.mubr.f32.mxu0 0.0
    %810 = vmatmul.mubr.f32.gmra.mrb[0].mxu0 %v740
    %v811 = vpop.f32.mrb[0].mxu0
    %v812 = vadd.f32 0.0, %v811
    %v813 = vpop.f32.mrb[0].mxu0
    %814 = vmatprep.mubr.f32.mxu0 0.0
    %815 = vmatmul.mubr.f32.gmra.mrb[0].mxu0 %v743
    %v816 = vpop.f32.mrb[0].mxu0
    %v817 = vadd.f32 0.0, %v816
    %v818 = vpop.f32.mrb[0].mxu0
    %819 = vdwg.mxu0
    %v821 = vsel %vm225, %v651, 0
    %v824 = vsel %vm225, %v653, 0
    %826 = vmatprep.subr.mxu0 0.0
    %827 = vmatpush1.msra.mxu0 %v208
    %828 = vmatprep.subr.mxu0 0.0
    %829 = vmatpush1.msra.mxu0 %v210
    %830 = vmatprep.subr.mxu0 0.0
    %831 = vmatpush1.msra.mxu0 0.0
    %832 = vmatprep.subr.mxu0 0.0
    %833 = vmatpush1.msra.mxu0 0.0
    %834 = vmatprep.subr.mxu0 0.0
    %835 = vmatpush1.msra.mxu0 0.0
    %836 = vmatprep.subr.mxu0 0.0
    %837 = vmatpush1.msra.mxu0 0.0
    %838 = vmatprep.subr.mxu0 0.0
    %839 = vmatpush1.msra.mxu0 0.0
    %840 = vmatprep.subr.mxu0 0.0
    %841 = vmatpush1.msra.mxu0 0.0
    %842 = vmatprep.subr.mxu0 0.0
    %843 = vmatpush1.msra.mxu0 0.0
    %844 = vmatprep.subr.mxu0 0.0
    %845 = vmatpush1.msra.mxu0 0.0
    %846 = vmatprep.subr.mxu0 0.0
    %847 = vmatpush1.msra.mxu0 0.0
    %848 = vmatprep.subr.mxu0 0.0
    %849 = vmatpush1.msra.mxu0 0.0
    %850 = vmatprep.subr.mxu0 0.0
    %851 = vmatpush1.msra.mxu0 0.0
    %852 = vmatprep.subr.mxu0 0.0
    %853 = vmatpush1.msra.mxu0 0.0
    %854 = vmatprep.subr.mxu0 0.0
    %855 = vmatpush1.msra.mxu0 0.0
    %856 = vmatprep.subr.mxu0 0.0
    %857 = vmatpush1.msra.mxu0 0.0
    %858 = vmatprep.subr.mxu0 0.0
    %859 = vmatpush1.msra.mxu0 0.0
    %860 = vmatprep.subr.mxu0 0.0
    %861 = vmatpush1.msra.mxu0 0.0
    %862 = vmatprep.subr.mxu0 0.0
    %863 = vmatpush1.msra.mxu0 0.0
    %864 = vmatprep.subr.mxu0 0.0
    %865 = vmatpush1.msra.mxu0 0.0
    %866 = vmatprep.subr.mxu0 0.0
    %867 = vmatpush1.msra.mxu0 0.0
    %868 = vmatprep.subr.mxu0 0.0
    %869 = vmatpush1.msra.mxu0 0.0
    %870 = vmatprep.subr.mxu0 0.0
    %871 = vmatpush1.msra.mxu0 0.0
    %872 = vmatprep.subr.mxu0 0.0
    %873 = vmatpush1.msra.mxu0 0.0
    %874 = vmatprep.subr.mxu0 0.0
    %875 = vmatpush1.msra.mxu0 0.0
    %876 = vmatprep.subr.mxu0 0.0
    %877 = vmatpush1.msra.mxu0 0.0
    %878 = vmatprep.subr.mxu0 0.0
    %879 = vmatpush1.msra.mxu0 0.0
    %880 = vmatprep.subr.mxu0 0.0
    %881 = vmatpush1.msra.mxu0 0.0
    %882 = vmatprep.subr.mxu0 0.0
    %883 = vmatpush1.msra.mxu0 0.0
    %884 = vmatprep.subr.mxu0 0.0
    %885 = vmatpush1.msra.mxu0 0.0
    %886 = vmatprep.subr.mxu0 0.0
    %887 = vmatpush1.msra.mxu0 0.0
    %888 = vmatprep.subr.mxu0 0.0
    %889 = vmatpush1.msra.mxu0 0.0
    %890 = vmatprep.mubr.f32.mxu0 0.0
    %891 = vmatmul.mubr.f32.gmra.mrb[0].mxu0 %v821
    %v892 = vpop.f32.mrb[0].mxu0
    %v893 = vadd.f32 0.0, %v892
    %v894 = vpop.f32.mrb[0].mxu0
    %895 = vmatprep.mubr.f32.mxu0 0.0
    %896 = vmatmul.mubr.f32.gmra.mrb[0].mxu0 %v824
    %v897 = vpop.f32.mrb[0].mxu0
    %v898 = vadd.f32 0.0, %v897
    %v899 = vpop.f32.mrb[0].mxu0
    %900 = vdwg.mxu0
    %v902 = vsel %vm225, %v655, 0
    %v905 = vsel %vm225, %v657, 0
    %907 = vmatprep.subr.mxu0 0.0
    %908 = vmatpush1.msra.mxu0 %v214
    %909 = vmatprep.subr.mxu0 0.0
    %910 = vmatpush1.msra.mxu0 %v216
    %911 = vmatprep.subr.mxu0 0.0
    %912 = vmatpush1.msra.mxu0 0.0
    %913 = vmatprep.subr.mxu0 0.0
    %914 = vmatpush1.msra.mxu0 0.0
    %915 = vmatprep.subr.mxu0 0.0
    %916 = vmatpush1.msra.mxu0 0.0
    %917 = vmatprep.subr.mxu0 0.0
    %918 = vmatpush1.msra.mxu0 0.0
    %919 = vmatprep.subr.mxu0 0.0
    %920 = vmatpush1.msra.mxu0 0.0
    %921 = vmatprep.subr.mxu0 0.0
    %922 = vmatpush1.msra.mxu0 0.0
    %923 = vmatprep.subr.mxu0 0.0
    %924 = vmatpush1.msra.mxu0 0.0
    %925 = vmatprep.subr.mxu0 0.0
    %926 = vmatpush1.msra.mxu0 0.0
    %927 = vmatprep.subr.mxu0 0.0
    %928 = vmatpush1.msra.mxu0 0.0
    %929 = vmatprep.subr.mxu0 0.0
    %930 = vmatpush1.msra.mxu0 0.0
    %931 = vmatprep.subr.mxu0 0.0
    %932 = vmatpush1.msra.mxu0 0.0
    %933 = vmatprep.subr.mxu0 0.0
    %934 = vmatpush1.msra.mxu0 0.0
    %935 = vmatprep.subr.mxu0 0.0
    %936 = vmatpush1.msra.mxu0 0.0
    %937 = vmatprep.subr.mxu0 0.0
    %938 = vmatpush1.msra.mxu0 0.0
    %939 = vmatprep.subr.mxu0 0.0
    %940 = vmatpush1.msra.mxu0 0.0
    %941 = vmatprep.subr.mxu0 0.0
    %942 = vmatpush1.msra.mxu0 0.0
    %943 = vmatprep.subr.mxu0 0.0
    %944 = vmatpush1.msra.mxu0 0.0
    %945 = vmatprep.subr.mxu0 0.0
    %946 = vmatpush1.msra.mxu0 0.0
    %947 = vmatprep.subr.mxu0 0.0
    %948 = vmatpush1.msra.mxu0 0.0
    %949 = vmatprep.subr.mxu0 0.0
    %950 = vmatpush1.msra.mxu0 0.0
    %951 = vmatprep.subr.mxu0 0.0
    %952 = vmatpush1.msra.mxu0 0.0
    %953 = vmatprep.subr.mxu0 0.0
    %954 = vmatpush1.msra.mxu0 0.0
    %955 = vmatprep.subr.mxu0 0.0
    %956 = vmatpush1.msra.mxu0 0.0
    %957 = vmatprep.subr.mxu0 0.0
    %958 = vmatpush1.msra.mxu0 0.0
    %959 = vmatprep.subr.mxu0 0.0
    %960 = vmatpush1.msra.mxu0 0.0
    %961 = vmatprep.subr.mxu0 0.0
    %962 = vmatpush1.msra.mxu0 0.0
    %963 = vmatprep.subr.mxu0 0.0
    %964 = vmatpush1.msra.mxu0 0.0
    %965 = vmatprep.subr.mxu0 0.0
    %966 = vmatpush1.msra.mxu0 0.0
    %967 = vmatprep.subr.mxu0 0.0
    %968 = vmatpush1.msra.mxu0 0.0
    %969 = vmatprep.subr.mxu0 0.0
    %970 = vmatpush1.msra.mxu0 0.0
    %971 = vmatprep.mubr.f32.mxu0 0.0
    %972 = vmatmul.mubr.f32.gmra.mrb[0].mxu0 %v902
    %v973 = vpop.f32.mrb[0].mxu0
    %v974 = vadd.f32 0.0, %v973
    %v975 = vpop.f32.mrb[0].mxu0
    %976 = vmatprep.mubr.f32.mxu0 0.0
    %977 = vmatmul.mubr.f32.gmra.mrb[0].mxu0 %v905
    %v978 = vpop.f32.mrb[0].mxu0
    %v979 = vadd.f32 0.0, %v978
    %v980 = vpop.f32.mrb[0].mxu0
    %981 = vdwg.mxu0
    %984 = vrot.lane.b32.xlu0 %v812, 16
    %v985 = vpop.permute.xlu0 %984
    %986 = vrot.lane.b32.xlu0 %v817, 16
    %v987 = vpop.permute.xlu0 %986
    %992 = vrot.lane.b32.xlu0 %v893, 32
    %v993 = vpop.permute.xlu0 %992
    %994 = vrot.lane.b32.xlu0 %v898, 32
    %v995 = vpop.permute.xlu0 %994
    %1000 = vrot.lane.b32.xlu0 %v974, 48
    %v1001 = vpop.permute.xlu0 %1000
    %1002 = vrot.lane.b32.xlu0 %v979, 48
    %v1003 = vpop.permute.xlu0 %1002
    %v1006 = vsel %vm225, %v731, %v985
    %v1007 = vsel %vm225, %v736, %v987
    %v1008 = vsel %vm42, %v1006, %v993
    %v1009 = vsel %vm42, %v1007, %v995
    %vm1010 = vcmask 392192
    %v1011 = vsel %vm1010, %v1008, %v1001
    %v1012 = vsel %vm1010, %v1009, %v1003
    %v1013 = vld [vmem:[%s5] sm:$0xff]
    %v1014 = vld [vmem:[%s5 + $0x8] sm:$0xff]
    %v1015 = vld [vmem:[%s5 + $0x10] sm:$0xff]
    %v1016 = vld [vmem:[%s5 + $0x18] sm:$0xff]
    %v1017 = vld [vmem:[%s5 + $0x20] sm:$0xff]
    %v1018 = vld [vmem:[%s5 + $0x28] sm:$0xff]
    %v1019 = vld [vmem:[%s5 + $0x30] sm:$0xff]
    %v1020 = vld [vmem:[%s5 + $0x38] sm:$0xff]
    %v1021 = vld [vmem:[%s6] sm:$0x1]
    %v1023 = vlaneseq
    %v1024 = vshrl.u32 %v1023, 7
    %v1025 = vsub.s32 0, %v1024
    %v1026 = vrot.slane %v1021, %v1025
    %vm1028 = vcmask 523264
    %v1030 = vsel %vm1028, %v1011, 0
    %v1033 = vsel %vm1028, %v1012, 0
    %1035 = vmatprep.subr.mxu0 0.0
    %1036 = vmatpush1.msra.mxu0 %v1013
    %1037 = vmatprep.subr.mxu0 0.0
    %1038 = vmatpush1.msra.mxu0 %v1014
    %1039 = vmatprep.subr.mxu0 0.0
    %1040 = vmatpush1.msra.mxu0 %v1015
    %1041 = vmatprep.subr.mxu0 0.0
    %1042 = vmatpush1.msra.mxu0 %v1016
    %1043 = vmatprep.subr.mxu0 0.0
    %1044 = vmatpush1.msra.mxu0 %v1017
    %1045 = vmatprep.subr.mxu0 0.0
    %1046 = vmatpush1.msra.mxu0 %v1018
    %1047 = vmatprep.subr.mxu0 0.0
    %1048 = vmatpush1.msra.mxu0 %v1019
    %1049 = vmatprep.subr.mxu0 0.0
    %1050 = vmatpush1.msra.mxu0 %v1020
    %1051 = vmatprep.subr.mxu0 0.0
    %1052 = vmatpush1.msra.mxu0 0.0
    %1053 = vmatprep.subr.mxu0 0.0
    %1054 = vmatpush1.msra.mxu0 0.0
    %1055 = vmatprep.subr.mxu0 0.0
    %1056 = vmatpush1.msra.mxu0 0.0
    %1057 = vmatprep.subr.mxu0 0.0
    %1058 = vmatpush1.msra.mxu0 0.0
    %1059 = vmatprep.subr.mxu0 0.0
    %1060 = vmatpush1.msra.mxu0 0.0
    %1061 = vmatprep.subr.mxu0 0.0
    %1062 = vmatpush1.msra.mxu0 0.0
    %1063 = vmatprep.subr.mxu0 0.0
    %1064 = vmatpush1.msra.mxu0 0.0
    %1065 = vmatprep.subr.mxu0 0.0
    %1066 = vmatpush1.msra.mxu0 0.0
    %1067 = vmatprep.subr.mxu0 0.0
    %1068 = vmatpush1.msra.mxu0 0.0
    %1069 = vmatprep.subr.mxu0 0.0
    %1070 = vmatpush1.msra.mxu0 0.0
    %1071 = vmatprep.subr.mxu0 0.0
    %1072 = vmatpush1.msra.mxu0 0.0
    %1073 = vmatprep.subr.mxu0 0.0
    %1074 = vmatpush1.msra.mxu0 0.0
    %1075 = vmatprep.subr.mxu0 0.0
    %1076 = vmatpush1.msra.mxu0 0.0
    %1077 = vmatprep.subr.mxu0 0.0
    %1078 = vmatpush1.msra.mxu0 0.0
    %1079 = vmatprep.subr.mxu0 0.0
    %1080 = vmatpush1.msra.mxu0 0.0
    %1081 = vmatprep.subr.mxu0 0.0
    %1082 = vmatpush1.msra.mxu0 0.0
    %1083 = vmatprep.subr.mxu0 0.0
    %1084 = vmatpush1.msra.mxu0 0.0
    %1085 = vmatprep.subr.mxu0 0.0
    %1086 = vmatpush1.msra.mxu0 0.0
    %1087 = vmatprep.subr.mxu0 0.0
    %1088 = vmatpush1.msra.mxu0 0.0
    %1089 = vmatprep.subr.mxu0 0.0
    %1090 = vmatpush1.msra.mxu0 0.0
    %1091 = vmatprep.subr.mxu0 0.0
    %1092 = vmatpush1.msra.mxu0 0.0
    %1093 = vmatprep.subr.mxu0 0.0
    %1094 = vmatpush1.msra.mxu0 0.0
    %1095 = vmatprep.subr.mxu0 0.0
    %1096 = vmatpush1.msra.mxu0 0.0
    %1097 = vmatprep.subr.mxu0 0.0
    %1098 = vmatpush1.msra.mxu0 0.0
    %1099 = vmatprep.mubr.f32.mxu0 0.0
    %1100 = vmatmul.mubr.f32.gmra.mrb[0].mxu0 %v1030
    %v1101 = vpop.f32.mrb[0].mxu0
    %v1102 = vadd.f32 %v1026, %v1101
    %v1103 = vpop.f32.mrb[0].mxu0
    %1104 = vmatprep.mubr.f32.mxu0 0.0
    %1105 = vmatmul.mubr.f32.gmra.mrb[0].mxu0 %v1033
    %v1106 = vpop.f32.mrb[0].mxu0
    %v1107 = vadd.f32 %v1026, %v1106
    %v1108 = vpop.f32.mrb[0].mxu0
    %1109 = vdwg.mxu0
    %v1110 = vadd.f32 %v1102, %v39
    %v1111 = vadd.f32 %v1107, %v40
    %v1112 = vsel %vm42, %v1110, 0.0
    %1113 = vadd.xlane.f32.xlu0 %v1112
    %v1114 = vpop.xlane.xlu0 %1113
    %v1115 = vsel %vm42, %v1111, 0.0
    %1116 = vadd.xlane.f32.xlu0 %v1115
    %v1117 = vpop.xlane.xlu0 %1116
    %v1118 = vmul.f32 %v1114, %v49
    %v1119 = vmul.f32 %v1117, %v49
    %v1120 = vsub.f32 %v1110, %v1118
    %v1121 = vsub.f32 %v1111, %v1119
    %v1122 = vmul.f32 %v1120, %v1120
    %v1123 = vmul.f32 %v1121, %v1121
    %v1124 = vsel %vm42, %v1122, 0.0
    %1125 = vadd.xlane.f32.xlu0 %v1124
    %v1126 = vpop.xlane.xlu0 %1125
    %v1127 = vsel %vm42, %v1123, 0.0
    %1128 = vadd.xlane.f32.xlu0 %v1127
    %v1129 = vpop.xlane.xlu0 %1128
    %v1130 = vmul.f32 %v1126, %v49
    %v1131 = vmul.f32 %v1129, %v49
    %v1132 = vadd.f32 %v1130, 1e-05
    %v1133 = vadd.f32 %v1131, 1e-05
    %v1134 = vrsqrt.pop %v1132
    %v1135 = vrsqrt.pop %v1133
    %v1136 = vmul.f32 %v1120, %v1134
    %v1137 = vmul.f32 %v1121, %v1135
    %v1138 = vlaneseq
    %v1139 = vshrl.u32 %v1138, 7
    %v1140 = vsub.s32 2, %v1139
    %v1141 = vrot.slane %v41, %v1140
    %v1142 = vmul.f32 %v1136, %v1141
    %v1143 = vmul.f32 %v1137, %v1141
    %v1144 = vlaneseq
    %v1145 = vshrl.u32 %v1144, 7
    %v1146 = vsub.s32 3, %v1145
    %v1147 = vrot.slane %v41, %v1146
    %v1148 = vadd.f32 %v1142, %v1147
    %v1149 = vadd.f32 %v1143, %v1147
    %v1150 = vld [vmem:[%s7] sm:$0xff]
    %v1151 = vld [vmem:[%s7 + $0x8] sm:$0xff]
    %v1152 = vld [vmem:[%s7 + $0x10] sm:$0xff]
    %v1153 = vld [vmem:[%s7 + $0x18] sm:$0xff]
    %v1154 = vld [vmem:[%s8] sm:$0x1]
    %v1156 = vlaneseq
    %v1157 = vshrl.u32 %v1156, 7
    %v1158 = vsub.s32 0, %v1157
    %v1159 = vrot.slane %v1154, %v1158
    %v1162 = vsel %vm42, %v1148, 0
    %v1165 = vsel %vm42, %v1149, 0
    %1167 = vmatprep.subr.mxu0 0.0
    %1168 = vmatpush1.msra.mxu0 %v1150
    %1169 = vmatprep.subr.mxu0 0.0
    %1170 = vmatpush1.msra.mxu0 %v1151
    %1171 = vmatprep.subr.mxu0 0.0
    %1172 = vmatpush1.msra.mxu0 %v1152
    %1173 = vmatprep.subr.mxu0 0.0
    %1174 = vmatpush1.msra.mxu0 %v1153
    %1175 = vmatprep.subr.mxu0 0.0
    %1176 = vmatpush1.msra.mxu0 0.0
    %1177 = vmatprep.subr.mxu0 0.0
    %1178 = vmatpush1.msra.mxu0 0.0
    %1179 = vmatprep.subr.mxu0 0.0
    %1180 = vmatpush1.msra.mxu0 0.0
    %1181 = vmatprep.subr.mxu0 0.0
    %1182 = vmatpush1.msra.mxu0 0.0
    %1183 = vmatprep.subr.mxu0 0.0
    %1184 = vmatpush1.msra.mxu0 0.0
    %1185 = vmatprep.subr.mxu0 0.0
    %1186 = vmatpush1.msra.mxu0 0.0
    %1187 = vmatprep.subr.mxu0 0.0
    %1188 = vmatpush1.msra.mxu0 0.0
    %1189 = vmatprep.subr.mxu0 0.0
    %1190 = vmatpush1.msra.mxu0 0.0
    %1191 = vmatprep.subr.mxu0 0.0
    %1192 = vmatpush1.msra.mxu0 0.0
    %1193 = vmatprep.subr.mxu0 0.0
    %1194 = vmatpush1.msra.mxu0 0.0
    %1195 = vmatprep.subr.mxu0 0.0
    %1196 = vmatpush1.msra.mxu0 0.0
    %1197 = vmatprep.subr.mxu0 0.0
    %1198 = vmatpush1.msra.mxu0 0.0
    %1199 = vmatprep.subr.mxu0 0.0
    %1200 = vmatpush1.msra.mxu0 0.0
    %1201 = vmatprep.subr.mxu0 0.0
    %1202 = vmatpush1.msra.mxu0 0.0
    %1203 = vmatprep.subr.mxu0 0.0
    %1204 = vmatpush1.msra.mxu0 0.0
    %1205 = vmatprep.subr.mxu0 0.0
    %1206 = vmatpush1.msra.mxu0 0.0
    %1207 = vmatprep.subr.mxu0 0.0
    %1208 = vmatpush1.msra.mxu0 0.0
    %1209 = vmatprep.subr.mxu0 0.0
    %1210 = vmatpush1.msra.mxu0 0.0
    %1211 = vmatprep.subr.mxu0 0.0
    %1212 = vmatpush1.msra.mxu0 0.0
    %1213 = vmatprep.subr.mxu0 0.0
    %1214 = vmatpush1.msra.mxu0 0.0
    %1215 = vmatprep.subr.mxu0 0.0
    %1216 = vmatpush1.msra.mxu0 0.0
    %1217 = vmatprep.subr.mxu0 0.0
    %1218 = vmatpush1.msra.mxu0 0.0
    %1219 = vmatprep.subr.mxu0 0.0
    %1220 = vmatpush1.msra.mxu0 0.0
    %1221 = vmatprep.subr.mxu0 0.0
    %1222 = vmatpush1.msra.mxu0 0.0
    %1223 = vmatprep.subr.mxu0 0.0
    %1224 = vmatpush1.msra.mxu0 0.0
    %1225 = vmatprep.subr.mxu0 0.0
    %1226 = vmatpush1.msra.mxu0 0.0
    %1227 = vmatprep.subr.mxu0 0.0
    %1228 = vmatpush1.msra.mxu0 0.0
    %1229 = vmatprep.subr.mxu0 0.0
    %1230 = vmatpush1.msra.mxu0 0.0
    %1231 = vmatprep.mubr.f32.mxu0 0.0
    %1232 = vmatmul.mubr.f32.gmra.mrb[0].mxu0 %v1162
    %v1233 = vpop.f32.mrb[0].mxu0
    %v1234 = vadd.f32 %v1159, %v1233
    %v1235 = vpop.f32.mrb[0].mxu0
    %1236 = vmatprep.mubr.f32.mxu0 0.0
    %1237 = vmatmul.mubr.f32.gmra.mrb[0].mxu0 %v1165
    %v1238 = vpop.f32.mrb[0].mxu0
    %v1239 = vadd.f32 %v1159, %v1238
    %v1240 = vpop.f32.mrb[0].mxu0
    %1241 = vdwg.mxu0
    %v1242 = vmax.f32 %v1234, 0.0
    %v1243 = vmax.f32 %v1239, 0.0
    %v1244 = vld [vmem:[%s9] sm:$0xff]
    %v1245 = vld [vmem:[%s9 + $0x8] sm:$0xff]
    %v1246 = vld [vmem:[%s9 + $0x10] sm:$0xff]
    %v1247 = vld [vmem:[%s9 + $0x18] sm:$0xff]
    %v1248 = vld [vmem:[%s9 + $0x20] sm:$0xff]
    %v1249 = vld [vmem:[%s9 + $0x28] sm:$0xff]
    %v1250 = vld [vmem:[%s9 + $0x30] sm:$0xff]
    %v1251 = vld [vmem:[%s9 + $0x38] sm:$0xff]
    %v1252 = vld [vmem:[%s9 + $0x40] sm:$0xff]
    %v1253 = vld [vmem:[%s9 + $0x48] sm:$0xff]
    %v1254 = vld [vmem:[%s9 + $0x50] sm:$0xff]
    %v1255 = vld [vmem:[%s9 + $0x58] sm:$0xff]
    %v1256 = vld [vmem:[%s9 + $0x60] sm:$0xff]
    %v1257 = vld [vmem:[%s9 + $0x68] sm:$0xff]
    %v1258 = vld [vmem:[%s9 + $0x70] sm:$0xff]
    %v1259 = vld [vmem:[%s9 + $0x78] sm:$0xff]
    %v1260 = vld [vmem:[%s10] sm:$0x1]
    %v1262 = vlaneseq
    %v1263 = vshrl.u32 %v1262, 7
    %v1264 = vsub.s32 0, %v1263
    %v1265 = vrot.slane %v1260, %v1264
    %1267 = vmatprep.subr.mxu0 0.0
    %1268 = vmatpush1.msra.mxu0 %v1244
    %1269 = vmatprep.subr.mxu0 0.0
    %1270 = vmatpush1.msra.mxu0 %v1245
    %1271 = vmatprep.subr.mxu0 0.0
    %1272 = vmatpush1.msra.mxu0 %v1246
    %1273 = vmatprep.subr.mxu0 0.0
    %1274 = vmatpush1.msra.mxu0 %v1247
    %1275 = vmatprep.subr.mxu0 0.0
    %1276 = vmatpush1.msra.mxu0 %v1248
    %1277 = vmatprep.subr.mxu0 0.0
    %1278 = vmatpush1.msra.mxu0 %v1249
    %1279 = vmatprep.subr.mxu0 0.0
    %1280 = vmatpush1.msra.mxu0 %v1250
    %1281 = vmatprep.subr.mxu0 0.0
    %1282 = vmatpush1.msra.mxu0 %v1251
    %1283 = vmatprep.subr.mxu0 0.0
    %1284 = vmatpush1.msra.mxu0 %v1252
    %1285 = vmatprep.subr.mxu0 0.0
    %1286 = vmatpush1.msra.mxu0 %v1253
    %1287 = vmatprep.subr.mxu0 0.0
    %1288 = vmatpush1.msra.mxu0 %v1254
    %1289 = vmatprep.subr.mxu0 0.0
    %1290 = vmatpush1.msra.mxu0 %v1255
    %1291 = vmatprep.subr.mxu0 0.0
    %1292 = vmatpush1.msra.mxu0 %v1256
    %1293 = vmatprep.subr.mxu0 0.0
    %1294 = vmatpush1.msra.mxu0 %v1257
    %1295 = vmatprep.subr.mxu0 0.0
    %1296 = vmatpush1.msra.mxu0 %v1258
    %1297 = vmatprep.subr.mxu0 0.0
    %1298 = vmatpush1.msra.mxu0 %v1259
    %1299 = vmatprep.subr.mxu0 0.0
    %1300 = vmatpush1.msra.mxu0 0.0
    %1301 = vmatprep.subr.mxu0 0.0
    %1302 = vmatpush1.msra.mxu0 0.0
    %1303 = vmatprep.subr.mxu0 0.0
    %1304 = vmatpush1.msra.mxu0 0.0
    %1305 = vmatprep.subr.mxu0 0.0
    %1306 = vmatpush1.msra.mxu0 0.0
    %1307 = vmatprep.subr.mxu0 0.0
    %1308 = vmatpush1.msra.mxu0 0.0
    %1309 = vmatprep.subr.mxu0 0.0
    %1310 = vmatpush1.msra.mxu0 0.0
    %1311 = vmatprep.subr.mxu0 0.0
    %1312 = vmatpush1.msra.mxu0 0.0
    %1313 = vmatprep.subr.mxu0 0.0
    %1314 = vmatpush1.msra.mxu0 0.0
    %1315 = vmatprep.subr.mxu0 0.0
    %1316 = vmatpush1.msra.mxu0 0.0
    %1317 = vmatprep.subr.mxu0 0.0
    %1318 = vmatpush1.msra.mxu0 0.0
    %1319 = vmatprep.subr.mxu0 0.0
    %1320 = vmatpush1.msra.mxu0 0.0
    %1321 = vmatprep.subr.mxu0 0.0
    %1322 = vmatpush1.msra.mxu0 0.0
    %1323 = vmatprep.subr.mxu0 0.0
    %1324 = vmatpush1.msra.mxu0 0.0
    %1325 = vmatprep.subr.mxu0 0.0
    %1326 = vmatpush1.msra.mxu0 0.0
    %1327 = vmatprep.subr.mxu0 0.0
    %1328 = vmatpush1.msra.mxu0 0.0
    %1329 = vmatprep.subr.mxu0 0.0
    %1330 = vmatpush1.msra.mxu0 0.0
    %1331 = vmatprep.mubr.f32.mxu0 0.0
    %1332 = vmatmul.mubr.f32.gmra.mrb[0].mxu0 %v1242
    %v1333 = vpop.f32.mrb[0].mxu0
    %v1334 = vadd.f32 %v1265, %v1333
    %v1335 = vpop.f32.mrb[0].mxu0
    %1336 = vmatprep.mubr.f32.mxu0 0.0
    %1337 = vmatmul.mubr.f32.gmra.mrb[0].mxu0 %v1243
    %v1338 = vpop.f32.mrb[0].mxu0
    %v1339 = vadd.f32 %v1265, %v1338
    %v1340 = vpop.f32.mrb[0].mxu0
    %1341 = vdwg.mxu0
    %v1342 = vadd.f32 %v1110, %v1334
    %v1343 = vadd.f32 %v1111, %v1339
    %1344 = vst.msk [vmem:[#allocation2] sm:$0xff] %vm42, %v1342
    %1345 = vst.msk [vmem:[#allocation2 + $0x8] sm:$0xff] %vm42, %v1343
    // Predicated region
    $region46: #{tpu_custom_call.1} parent=1 // pred_check
      _
    $region47: #{tpu_custom_call.1} parent=1 // pred_check_branch
      %1347 = sbr.rel (0) target = $region49
    $region48: #{tpu_custom_call.1} parent=1 // pred_region
      %s1349 = ssub.s32 256, 256
      %1350 = vsyncadd [#allocation3], %s1349
      %s1351 = sshll.u32 [#allocation2], 4
      %s1352 = int_to_ptr.vmem [resolvable:$true] %s1351
      %1357 = dma.vmem_to_hbm [thread:$0]  %s1352, 256, %s11, [#allocation3], 128, 128, 8
    $region49: #{tpu_custom_call.1} parent=1 // pred_fallthru
      _
    // Predicated region
    $region50: #{tpu_custom_call.1} parent=1 // pred_check
      _
    $region51: #{tpu_custom_call.1} parent=1 // pred_check_branch
      %1359 = sbr.rel (0) target = $region53
    $region52: #{tpu_custom_call.1} parent=1 // pred_region
      %1360 = dma.done [#allocation3], 256
    $region53: #{tpu_custom_call.1} parent=1 // pred_fallthru
      _
    %1361 = vsyncpa [#allocation3], 1

</llo_original>
